<compile_context>
chip_gen: v7x
topology: tpu7x:2x2x1
jax: 0.10.0
libtpu: 0.0.40
codegen_flags: <defaults>
</compile_context>

<pallas_src>
import functools
import math

import jax
import jax.numpy as jnp
from jax import lax
from jax.experimental import pallas as pl
from jax.experimental.pallas import tpu as pltpu


# ----------------------------------------------------------------------------
# Small helpers
# ----------------------------------------------------------------------------
def _round_up(x, m):
    return ((x + m - 1) // m) * m


def _choose_time_tile(T):
    # Per-grid-step overhead (~0.35 us) is amortised with >=512-frame tiles; at
    # tile=512 the working set (bf16 frames + f32 intermediates, double
    # buffered) is only a few MiB, far below every chip's scoped-VMEM default.
    if T <= 512:
        return _round_up(max(T, 1), 128)
    return 512


# ----------------------------------------------------------------------------
# Constant matrices (built once; equivalent to torchaudio Spectrogram /
# MelScale / create_dct initialisation).
# ----------------------------------------------------------------------------
def build_mfcc_constants(sample_rate, n_mfcc, n_fft, n_mels, remove_zeroth_coef):
    n_freq = n_fft // 2 + 1

    # Periodic Hann window folded into the real/imag DFT matrices.
    n = jnp.arange(n_fft, dtype=jnp.float32)
    window = 0.5 - 0.5 * jnp.cos(2.0 * jnp.pi * n / n_fft)
    f = jnp.arange(n_freq, dtype=jnp.float32)
    ang = 2.0 * jnp.pi * n[:, None] * f[None, :] / n_fft           # (n_fft, n_freq)
    cw = (window[:, None] * jnp.cos(ang)).astype(jnp.float32)
    sw = (window[:, None] * jnp.sin(ang)).astype(jnp.float32)

    # HTK mel filterbank, norm=None (torchaudio melscale_fbanks defaults).
    all_freqs = jnp.linspace(0.0, sample_rate / 2.0, n_freq)
    m_min = 2595.0 * math.log10(1.0 + 0.0 / 700.0)
    m_max = 2595.0 * math.log10(1.0 + (sample_rate / 2.0) / 700.0)
    m_pts = jnp.linspace(m_min, m_max, n_mels + 2)
    f_pts = 700.0 * (jnp.power(10.0, m_pts / 2595.0) - 1.0)
    f_diff = f_pts[1:] - f_pts[:-1]
    slopes = f_pts[None, :] - all_freqs[:, None]                   # (n_freq, n_mels+2)
    down = -slopes[:, :-2] / f_diff[:-1]
    up = slopes[:, 2:] / f_diff[1:]
    mel_fb = jnp.maximum(0.0, jnp.minimum(down, up)).astype(jnp.float32)  # (n_freq, n_mels)

    # Drop the Nyquist bin when its filterbank row is (numerically) all zero —
    # true for HTK filters with f_max = sr/2 — so re/im/power/mel intermediates
    # are exactly 128 lanes (1 vreg row) instead of 129.
    if float(jnp.max(jnp.abs(mel_fb[-1, :]))) < 1e-4:
        cw, sw, mel_fb = cw[:, :-1], sw[:, :-1], mel_fb[:-1, :]

    # DCT-II, ortho norm (torchaudio create_dct); drop coefficient 0 if asked.
    n_coef_full = n_mfcc + 1 if remove_zeroth_coef else n_mfcc
    mel_idx = jnp.arange(n_mels, dtype=jnp.float32)
    k = jnp.arange(n_coef_full, dtype=jnp.float32)
    dct = jnp.cos(jnp.pi / n_mels * (mel_idx[:, None] + 0.5) * k[None, :])
    dct = dct.at[:, 0].multiply(1.0 / math.sqrt(2.0))
    dct = dct * math.sqrt(2.0 / n_mels)
    if remove_zeroth_coef:
        dct = dct[:, 1:]
    return cw, sw, mel_fb, dct.astype(jnp.float32)                 # (n_mels, n_coef)


def pack_kernel_weights(consts):
    """Kernel-side (time-last) weights: fused bf16 DFT, mel^T, dB-scaled DCT^T."""
    cw, sw, mel_fb, dct = consts
    w_t = jnp.concatenate([cw.T, sw.T], axis=0).astype(jnp.bfloat16)  # (2*n_freq, n_fft)
    mel_t = mel_fb.T.astype(jnp.float32)                              # (n_mels, n_freq)
    # Fold the 10/ln(10) dB scale into the (linear) DCT; the kernel uses ln().
    dct_t = (dct.T * (10.0 / math.log(10.0))).astype(jnp.float32)     # (n_coef, n_mels)
    return w_t, mel_t, dct_t


# ----------------------------------------------------------------------------
# Kernel A: windowed power spectrum -> mel -> dB -> DCT, per (batch, time tile)
# ----------------------------------------------------------------------------
def _mfcc_kernel(frames_ref, w_ref, mel_ref, dct_ref, o_ref, *, n_freq):
    x = frames_ref[0]                                              # (n_fft, tile_t) bf16
    # Fused windowed DFT: one bf16 MXU matmul -> [re ; im] stacked on sublanes.
    spec = jnp.dot(w_ref[...], x, preferred_element_type=jnp.float32)
    re = spec[:n_freq]
    im = spec[n_freq:]
    power = re * re + im * im                                      # (n_freq, tile_t)
    mel = jnp.dot(mel_ref[...], power, preferred_element_type=jnp.float32)
    # AmplitudeToDB(power): 10*log10(clamp(x, 1e-10)); the 10/ln(10) scale is
    # folded into dct_ref, so a plain ln() suffices here.
    # TODO(synk): top_db=80 clamp needs a per-sample global max (2-pass); omitted.
    logmel = jnp.log(jnp.maximum(mel, 1e-10))
    o_ref[0] = jnp.dot(dct_ref[...], logmel,
                       preferred_element_type=jnp.float32).astype(o_ref.dtype)


def mfcc_pallas(frames, w_t, mel_t, dct_t, *, tile_t):
    B, n_fft, T_pad = frames.shape
    n_coef = dct_t.shape[0]
    kernel = functools.partial(_mfcc_kernel, n_freq=mel_t.shape[1])
    return pl.pallas_call(
        kernel,
        out_shape=jax.ShapeDtypeStruct((B, n_coef, T_pad), jnp.float32),
        grid_spec=pltpu.PrefetchScalarGridSpec(
            num_scalar_prefetch=0,
            grid=(B, T_pad // tile_t),
            in_specs=[
                pl.BlockSpec((1, n_fft, tile_t), lambda b, t: (b, 0, t)),
                pl.BlockSpec(w_t.shape, lambda b, t: (0, 0)),      # resident weights
                pl.BlockSpec(mel_t.shape, lambda b, t: (0, 0)),
                pl.BlockSpec(dct_t.shape, lambda b, t: (0, 0)),
            ],
            out_specs=pl.BlockSpec((1, n_coef, tile_t), lambda b, t: (b, 0, t)),
        ),
        compiler_params=pltpu.CompilerParams(
            dimension_semantics=("parallel", "parallel")),
    )(frames, w_t, mel_t, dct_t)


# ----------------------------------------------------------------------------
# Kernel B: deltas + delta-deltas (5-tap shifted-add filter) + BatchNorm affine
# ----------------------------------------------------------------------------
def _five_tap_valid(x):
    # 'valid' ComputeDeltas(win_length=5) filter; out[:, i] is centred at x[:, i+2]:
    #   d = (2*(x[i+4]-x[i]) + (x[i+3]-x[i+1])) / 10
    L = x.shape[1]
    return (2.0 * (x[:, 4:L] - x[:, 0:L - 4]) +
            (x[:, 3:L - 1] - x[:, 1:L - 3])) * 0.1


def _deltas_bn_kernel(x_ref, scale_ref, shift_ref, o_ref, *, use_deltas):
    xin = x_ref[0]                                  # (C, T+8) if use_deltas else (C, T)
    if use_deltas:
        L = xin.shape[1]
        T = L - 8
        # Stage 1: deltas over the (wrapper-side) edge-replicated sequence.
        # d1 columns cover original positions [-2, T+2).
        d1 = _five_tap_valid(xin)                   # (C, T+4)
        # Replicate-fix the out-of-range columns so stage 2 sees torch-exact
        # replicate padding of the *delta* sequence (not deltas of replicated x).
        pos = lax.broadcasted_iota(jnp.int32, d1.shape, 1)
        d1 = jnp.where(pos < 2, d1[:, 2:3], d1)
        d1 = jnp.where(pos >= T + 2, d1[:, T + 1:T + 2], d1)
        d2 = _five_tap_valid(d1)                    # (C, T), positions [0, T)
        segs = (xin[:, 4:4 + T], d1[:, 2:2 + T], d2)
    else:
        segs = (xin,)
    for s, seg in enumerate(segs):                  # fused BatchNorm1d (eval) affine
        o_ref[0, s] = (seg * scale_ref[s] + shift_ref[s]).astype(o_ref.dtype)


def deltas_bn_pallas(mfcc, scale, shift, *, use_deltas):
    B, C, T = mfcc.shape
    n_seg = 3 if use_deltas else 1
    # Edge-replicate halo of 4 frames gives exact ComputeDeltas boundary handling.
    x_in = jnp.pad(mfcc, ((0, 0), (0, 0), (4, 4)), mode="edge") if use_deltas else mfcc
    kernel = functools.partial(_deltas_bn_kernel, use_deltas=use_deltas)
    out = pl.pallas_call(
        kernel,
        out_shape=jax.ShapeDtypeStruct((B, n_seg, C, T), jnp.float32),
        grid_spec=pltpu.PrefetchScalarGridSpec(
            num_scalar_prefetch=0,
            grid=(B,),
            in_specs=[
                pl.BlockSpec((1, C, x_in.shape[-1]), lambda b: (b, 0, 0)),
                pl.BlockSpec(scale.shape, lambda b: (0, 0, 0)),
                pl.BlockSpec(shift.shape, lambda b: (0, 0, 0)),
            ],
            out_specs=pl.BlockSpec((1, n_seg, C, T), lambda b: (b, 0, 0, 0)),
        ),
        compiler_params=pltpu.CompilerParams(dimension_semantics=("parallel",)),
    )(x_in, scale, shift)
    # (B, n_seg, C, T) -> (B, n_seg*C, T) is the contiguous torch.cat layout.
    return out.reshape(B, n_seg * C, T)


# ----------------------------------------------------------------------------
# Full forward pass (wrapper glue: reflect-pad + framing + length conversion)
# ----------------------------------------------------------------------------
def _frame_signal_time_last(signals, n_fft, hop_length, T_pad):
    """(B, N) -> (B, n_fft, T_pad) frames with TIME as the trailing (lane) axis."""
    B, N = signals.shape
    pad = n_fft // 2
    padded = jnp.pad(signals, ((0, 0), (pad, pad)), mode="reflect")   # center=True
    need = (T_pad - 1) * hop_length + n_fft
    if need > padded.shape[1]:
        padded = jnp.pad(padded, ((0, 0), (0, need - padded.shape[1])))
    idx = jnp.arange(n_fft)[:, None] + (jnp.arange(T_pad) * hop_length)[None, :]
    return padded[:, idx]                                             # (B, n_fft, T_pad)


def mfcc_layer_forward(signals, lengths, kernel_weights, bn_scale, bn_shift, *,
                       n_fft, hop_length, use_deltas, normalize_features):
    w_t, mel_t, dct_t = kernel_weights
    B, N = signals.shape
    T = 1 + N // hop_length
    tile_t = _choose_time_tile(T)
    T_pad = _round_up(T, tile_t)

    # bf16 frames: halves the dominant HBM stream; f32 accumulation in the MXU.
    frames = _frame_signal_time_last(signals.astype(jnp.bfloat16),
                                     n_fft, hop_length, T_pad)
    mfcc = mfcc_pallas(frames, w_t, mel_t, dct_t, tile_t=tile_t)[:, :, :T]

    C = mfcc.shape[1]
    n_seg = 3 if use_deltas else 1
    if normalize_features:
        scale = bn_scale.reshape(n_seg, C, 1).astype(jnp.float32)
        shift = bn_shift.reshape(n_seg, C, 1).astype(jnp.float32)
    else:
        scale = jnp.ones((n_seg, C, 1), jnp.float32)
        shift = jnp.zeros((n_seg, C, 1), jnp.float32)
    feats = deltas_bn_pallas(mfcc, scale, shift, use_deltas=use_deltas)

    # librosa.samples_to_frames(x, hop_length=hop, n_fft=n_fft)
    #   == floor((x - n_fft//2) / hop)   (offset = n_fft//2 when n_fft is given).
    lengths_frames = ((lengths - n_fft // 2) // hop_length).astype(jnp.int32)
    return feats, lengths_frames


# ----------------------------------------------------------------------------
# Pure-JAX reference (time-first orientation, separate cw/sw, explicit dB scale
# -> structurally independent check of the kernel restructuring).
# ----------------------------------------------------------------------------
def _delta_ref(x):
    first = x[..., :1]
    last = x[..., -1:]
    xp = jnp.concatenate([first, first, x, last, last], axis=-1)
    return (2.0 * (xp[..., 4:] - xp[..., :-4]) +
            (xp[..., 3:-1] - xp[..., 1:-3])) * 0.1


def mfcc_reference(signals, lengths, consts, bn_scale, bn_shift, *,
                   n_fft, hop_length, use_deltas, normalize_features):
    cw, sw, mel_fb, dct = consts
    hp = lax.Precision.HIGHEST
    B, N = signals.shape
    pad = n_fft // 2
    padded = jnp.pad(signals, ((0, 0), (pad, pad)), mode="reflect")
    T = 1 + N // hop_length
    idx = (jnp.arange(T) * hop_length)[:, None] + jnp.arange(n_fft)[None, :]
    frames = padded[:, idx]                                           # (B, T, n_fft)
    re = jnp.dot(frames, cw, precision=hp)
    im = jnp.dot(frames, sw, precision=hp)
    power = re * re + im * im
    mel = jnp.dot(power, mel_fb, precision=hp)
    db = 10.0 * jnp.log10(jnp.maximum(mel, 1e-10))
    mfcc = jnp.swapaxes(jnp.dot(db, dct, precision=hp), 1, 2)         # (B, C, T)
    feats = mfcc
    if use_deltas:
        d1 = _delta_ref(mfcc)
        d2 = _delta_ref(d1)
        feats = jnp.concatenate([mfcc, d1, d2], axis=1)
    if normalize_features:
        feats = feats * bn_scale[None, :, None] + bn_shift[None, :, None]
    lengths_frames = ((lengths - n_fft // 2) // hop_length).astype(jnp.int32)
    return feats, lengths_frames


# ----------------------------------------------------------------------------
# Demo / self-check
# ----------------------------------------------------------------------------
if __name__ == "__main__":
    SAMPLE_RATE = 16000
    N_MFCC = 13
    N_FFT = 256
    HOP = 128
    N_MELS = 128                 # torchaudio MelSpectrogram default
    USE_DELTAS = True
    NORMALIZE = True
    REMOVE_ZEROTH = True

    B, N = 2, 2048               # small, module-consistent shapes
    key = jax.random.PRNGKey(0)
    k_sig, k_w, k_b, k_m, k_v = jax.random.split(key, 5)
    signals = jax.random.normal(k_sig, (B, N), dtype=jnp.float32)
    lengths = jnp.array([N, 1600], dtype=jnp.int32)

    consts = build_mfcc_constants(SAMPLE_RATE, N_MFCC, N_FFT, N_MELS, REMOVE_ZEROTH)
    kernel_weights = pack_kernel_weights(consts)

    # BatchNorm1d in eval mode with folded running stats / affine params.
    num_features = N_MFCC * (3 if USE_DELTAS else 1)
    weight = 1.0 + 0.1 * jax.random.normal(k_w, (num_features,), jnp.float32)
    bias = 0.1 * jax.random.normal(k_b, (num_features,), jnp.float32)
    running_mean = jax.random.normal(k_m, (num_features,), jnp.float32)
    running_var = jnp.abs(jax.random.normal(k_v, (num_features,), jnp.float32)) + 0.5
    eps = 1e-5
    bn_scale = weight / jnp.sqrt(running_var + eps)
    bn_shift = bias - running_mean * bn_scale

    fwd = jax.jit(functools.partial(
        mfcc_layer_forward, n_fft=N_FFT, hop_length=HOP,
        use_deltas=USE_DELTAS, normalize_features=NORMALIZE))
    feats, len_frames = fwd(signals, lengths, kernel_weights, bn_scale, bn_shift)
    feats = jax.block_until_ready(feats)
    len_frames = jax.block_until_ready(len_frames)

    ref_feats, ref_len = mfcc_reference(
        signals, lengths, consts, bn_scale, bn_shift,
        n_fft=N_FFT, hop_length=HOP,
        use_deltas=USE_DELTAS, normalize_features=NORMALIZE)

    T = 1 + N // HOP
    assert feats.shape == (B, num_features, T), feats.shape
    assert feats.dtype == jnp.float32
    assert bool(jnp.all(len_frames == ref_len))
    assert bool(jnp.all(jnp.isfinite(feats)))

    # Normalized Frobenius error: robust to MXU/bf16 precision, catches structure bugs.
    rel_err = float(jnp.linalg.norm(feats - ref_feats) /
                    (jnp.linalg.norm(ref_feats) + 1e-6))
    assert rel_err < 3e-2, f"mismatch vs reference: rel_err={rel_err}"

    print("KERNEL_OK")
</pallas_src>

<mosaic_0001>
module attributes {stable_mosaic.version = 11 : i64} {
  func.func @_mfcc_kernel(%arg0: i32, %arg1: i32, %arg2: memref<1x256x128xbf16, #tpu.memory_space<vmem>>, %arg3: memref<256x256xbf16, #tpu.memory_space<vmem>>, %arg4: memref<128x128xf32, #tpu.memory_space<vmem>>, %arg5: memref<13x128xf32, #tpu.memory_space<vmem>>, %arg6: memref<1x13x128xf32, #tpu.memory_space<vmem>>) attributes {dimension_semantics = [#tpu.dimension_semantics<parallel>, #tpu.dimension_semantics<parallel>], iteration_bounds = array<i64: 2, 1>, scalar_prefetch = 0 : i64, scratch_operands = 0 : i64, tpu.core_type = #tpu.core_type<tc>, window_params = [{transform_indices = @transform_0, window_bounds = array<i64: 1, 256, 128>}, {pipeline_mode = #tpu.pipeline_mode<synchronous>, transform_indices = @transform_1, window_bounds = array<i64: 256, 256>}, {pipeline_mode = #tpu.pipeline_mode<synchronous>, transform_indices = @transform_2, window_bounds = array<i64: 128, 128>}, {pipeline_mode = #tpu.pipeline_mode<synchronous>, transform_indices = @transform_3, window_bounds = array<i64: 13, 128>}, {transform_indices = @transform_4, window_bounds = array<i64: 1, 13, 128>}]} {
    %c0 = arith.constant 0 : index
    %c0_0 = arith.constant 0 : index
    %c0_1 = arith.constant 0 : index
    %0 = vector.load %arg2[%c0, %c0_0, %c0_1] : memref<1x256x128xbf16, #tpu.memory_space<vmem>>, vector<1x256x128xbf16>
    %1 = vector.shape_cast %0 : vector<1x256x128xbf16> to vector<256x128xbf16>
    %c0_2 = arith.constant 0 : index
    %c0_3 = arith.constant 0 : index
    %2 = vector.load %arg3[%c0_2, %c0_3] : memref<256x256xbf16, #tpu.memory_space<vmem>>, vector<256x256xbf16>
    %cst = arith.constant dense<0.000000e+00> : vector<256x128xf32>
    %3 = tpu.matmul %2, %1, %cst {dimension_numbers = #tpu.dot_dimension_numbers<[1], [0], [0], [1], [0, 0, 1, 1], [], []>} : vector<256x256xbf16>, vector<256x128xbf16>, vector<256x128xf32> -> vector<256x128xf32>
    %4 = vector.extract_strided_slice %3 {offsets = [0, 0], sizes = [128, 128], strides = [1, 1]} : vector<256x128xf32> to vector<128x128xf32>
    %5 = vector.extract_strided_slice %3 {offsets = [128, 0], sizes = [128, 128], strides = [1, 1]} : vector<256x128xf32> to vector<128x128xf32>
    %6 = arith.mulf %4, %4 : vector<128x128xf32>
    %7 = arith.mulf %5, %5 : vector<128x128xf32>
    %8 = arith.addf %6, %7 : vector<128x128xf32>
    %c0_4 = arith.constant 0 : index
    %c0_5 = arith.constant 0 : index
    %9 = vector.load %arg4[%c0_4, %c0_5] : memref<128x128xf32, #tpu.memory_space<vmem>>, vector<128x128xf32>
    %cst_6 = arith.constant dense<0.000000e+00> : vector<128x128xf32>
    %10 = tpu.matmul %9, %8, %cst_6 {dimension_numbers = #tpu.dot_dimension_numbers<[1], [0], [0], [1], [0, 0, 1, 1], [], []>} : vector<128x128xf32>, vector<128x128xf32>, vector<128x128xf32> -> vector<128x128xf32>
    %cst_7 = arith.constant 1.000000e-10 : f32
    %11 = vector.broadcast %cst_7 : f32 to vector<128x128xf32>
    %12 = arith.maximumf %10, %11 : vector<128x128xf32>
    %13 = math.log %12 : vector<128x128xf32>
    %c0_8 = arith.constant 0 : index
    %c0_9 = arith.constant 0 : index
    %14 = vector.load %arg5[%c0_8, %c0_9] : memref<13x128xf32, #tpu.memory_space<vmem>>, vector<13x128xf32>
    %cst_10 = arith.constant dense<0.000000e+00> : vector<13x128xf32>
    %15 = tpu.matmul %14, %13, %cst_10 {dimension_numbers = #tpu.dot_dimension_numbers<[1], [0], [0], [1], [0, 0, 1, 1], [], []>} : vector<13x128xf32>, vector<128x128xf32>, vector<13x128xf32> -> vector<13x128xf32>
    %c0_11 = arith.constant 0 : index
    %c0_12 = arith.constant 0 : index
    %c0_13 = arith.constant 0 : index
    %16 = vector.load %arg6[%c0_11, %c0_12, %c0_13] : memref<1x13x128xf32, #tpu.memory_space<vmem>>, vector<1x13x128xf32>
    %17 = vector.shape_cast %16 : vector<1x13x128xf32> to vector<13x128xf32>
    %18 = vector.shape_cast %15 : vector<13x128xf32> to vector<1x13x128xf32>
    tpu.vector_store %arg6[%c0_11, %c0_12, %c0_13], %18 {strides = array<i32>} : memref<1x13x128xf32, #tpu.memory_space<vmem>>, vector<1x13x128xf32>,
    return
  }
  func.func @transform_0(%arg0: i32, %arg1: i32) -> (i32, i32, i32) {
    %c0_i32 = arith.constant 0 : i32
    %c0_i32_0 = arith.constant 0 : i32
    return %arg0, %c0_i32, %arg1 : i32, i32, i32
  }
  func.func @transform_1(%arg0: i32, %arg1: i32) -> (i32, i32) {
    %c0_i32 = arith.constant 0 : i32
    %c0_i32_0 = arith.constant 0 : i32
    %c0_i32_1 = arith.constant 0 : i32
    return %c0_i32, %c0_i32_0 : i32, i32
  }
  func.func @transform_2(%arg0: i32, %arg1: i32) -> (i32, i32) {
    %c0_i32 = arith.constant 0 : i32
    %c0_i32_0 = arith.constant 0 : i32
    %c0_i32_1 = arith.constant 0 : i32
    return %c0_i32, %c0_i32_0 : i32, i32
  }
  func.func @transform_3(%arg0: i32, %arg1: i32) -> (i32, i32) {
    %c0_i32 = arith.constant 0 : i32
    %c0_i32_0 = arith.constant 0 : i32
    %c0_i32_1 = arith.constant 0 : i32
    return %c0_i32, %c0_i32_0 : i32, i32
  }
  func.func @transform_4(%arg0: i32, %arg1: i32) -> (i32, i32, i32) {
    %c0_i32 = arith.constant 0 : i32
    %c0_i32_0 = arith.constant 0 : i32
    return %arg0, %c0_i32, %arg1 : i32, i32, i32
  }
}

module attributes {stable_mosaic.version = 11 : i64} {
  func.func @_deltas_bn_kernel(%arg0: i32, %arg1: memref<1x13x25xf32, #tpu.memory_space<vmem>>, %arg2: memref<3x13x1xf32, #tpu.memory_space<vmem>>, %arg3: memref<3x13x1xf32, #tpu.memory_space<vmem>>, %arg4: memref<1x3x13x17xf32, #tpu.memory_space<vmem>>) attributes {dimension_semantics = [#tpu.dimension_semantics<parallel>], iteration_bounds = array<i64: 2>, scalar_prefetch = 0 : i64, scratch_operands = 0 : i64, tpu.core_type = #tpu.core_type<tc>, window_params = [{transform_indices = @transform_0, window_bounds = array<i64: 1, 13, 25>}, {pipeline_mode = #tpu.pipeline_mode<synchronous>, transform_indices = @transform_1, window_bounds = array<i64: 3, 13, 1>}, {pipeline_mode = #tpu.pipeline_mode<synchronous>, transform_indices = @transform_2, window_bounds = array<i64: 3, 13, 1>}, {transform_indices = @transform_3, window_bounds = array<i64: 1, 3, 13, 17>}]} {
    %c0 = arith.constant 0 : index
    %c0_0 = arith.constant 0 : index
    %c0_1 = arith.constant 0 : index
    %0 = vector.load %arg1[%c0, %c0_0, %c0_1] : memref<1x13x25xf32, #tpu.memory_space<vmem>>, vector<1x13x25xf32>
    %1 = vector.shape_cast %0 : vector<1x13x25xf32> to vector<13x25xf32>
    %2 = vector.extract_strided_slice %1 {offsets = [0, 4], sizes = [13, 21], strides = [1, 1]} : vector<13x25xf32> to vector<13x21xf32>
    %3 = vector.extract_strided_slice %1 {offsets = [0, 0], sizes = [13, 21], strides = [1, 1]} : vector<13x25xf32> to vector<13x21xf32>
    %4 = arith.subf %2, %3 : vector<13x21xf32>
    %cst = arith.constant 2.000000e+00 : f32
    %5 = vector.broadcast %cst : f32 to vector<13x21xf32>
    %6 = arith.mulf %5, %4 : vector<13x21xf32>
    %7 = vector.extract_strided_slice %1 {offsets = [0, 3], sizes = [13, 21], strides = [1, 1]} : vector<13x25xf32> to vector<13x21xf32>
    %8 = vector.extract_strided_slice %1 {offsets = [0, 1], sizes = [13, 21], strides = [1, 1]} : vector<13x25xf32> to vector<13x21xf32>
    %9 = arith.subf %7, %8 : vector<13x21xf32>
    %10 = arith.addf %6, %9 : vector<13x21xf32>
    %cst_2 = arith.constant 1.000000e-01 : f32
    %11 = vector.broadcast %cst_2 : f32 to vector<13x21xf32>
    %12 = arith.mulf %10, %11 : vector<13x21xf32>
    %13 = tpu.iota {dimensions = array<i32: 1>} : vector<13x21xi32>
    %c2_i32 = arith.constant 2 : i32
    %14 = vector.broadcast %c2_i32 : i32 to vector<13x21xi32>
    %15 = arith.cmpi slt, %13, %14 : vector<13x21xi32>
    %16 = vector.extract_strided_slice %12 {offsets = [0, 2], sizes = [13, 1], strides = [1, 1]} : vector<13x21xf32> to vector<13x1xf32>
    %17 = vector.shape_cast %16 : vector<13x1xf32> to vector<13x1xf32>
    %18 = vector.broadcast %17 : vector<13x1xf32> to vector<13x21xf32>
    %19 = arith.select %15, %18, %12 : vector<13x21xi1>, vector<13x21xf32>
    %c19_i32 = arith.constant 19 : i32
    %20 = vector.broadcast %c19_i32 : i32 to vector<13x21xi32>
    %21 = arith.cmpi sge, %13, %20 : vector<13x21xi32>
    %22 = vector.extract_strided_slice %19 {offsets = [0, 18], sizes = [13, 1], strides = [1, 1]} : vector<13x21xf32> to vector<13x1xf32>
    %23 = vector.shape_cast %22 : vector<13x1xf32> to vector<13x1xf32>
    %24 = vector.broadcast %23 : vector<13x1xf32> to vector<13x21xf32>
    %25 = arith.select %21, %24, %19 : vector<13x21xi1>, vector<13x21xf32>
    %26 = vector.extract_strided_slice %25 {offsets = [0, 4], sizes = [13, 17], strides = [1, 1]} : vector<13x21xf32> to vector<13x17xf32>
    %27 = vector.extract_strided_slice %25 {offsets = [0, 0], sizes = [13, 17], strides = [1, 1]} : vector<13x21xf32> to vector<13x17xf32>
    %28 = arith.subf %26, %27 : vector<13x17xf32>
    %cst_3 = arith.constant 2.000000e+00 : f32
    %29 = vector.broadcast %cst_3 : f32 to vector<13x17xf32>
    %30 = arith.mulf %29, %28 : vector<13x17xf32>
    %31 = vector.extract_strided_slice %25 {offsets = [0, 3], sizes = [13, 17], strides = [1, 1]} : vector<13x21xf32> to vector<13x17xf32>
    %32 = vector.extract_strided_slice %25 {offsets = [0, 1], sizes = [13, 17], strides = [1, 1]} : vector<13x21xf32> to vector<13x17xf32>
    %33 = arith.subf %31, %32 : vector<13x17xf32>
    %34 = arith.addf %30, %33 : vector<13x17xf32>
    %cst_4 = arith.constant 1.000000e-01 : f32
    %35 = vector.broadcast %cst_4 : f32 to vector<13x17xf32>
    %36 = arith.mulf %34, %35 : vector<13x17xf32>
    %37 = vector.extract_strided_slice %1 {offsets = [0, 4], sizes = [13, 17], strides = [1, 1]} : vector<13x25xf32> to vector<13x17xf32>
    %38 = vector.extract_strided_slice %25 {offsets = [0, 2], sizes = [13, 17], strides = [1, 1]} : vector<13x21xf32> to vector<13x17xf32>
    %c0_5 = arith.constant 0 : index
    %c0_6 = arith.constant 0 : index
    %c0_7 = arith.constant 0 : index
    %39 = vector.load %arg2[%c0_5, %c0_6, %c0_7] : memref<3x13x1xf32, #tpu.memory_space<vmem>>, vector<1x13x1xf32>
    %40 = vector.shape_cast %39 : vector<1x13x1xf32> to vector<13x1xf32>
    %41 = vector.broadcast %40 : vector<13x1xf32> to vector<13x17xf32>
    %42 = arith.mulf %37, %41 : vector<13x17xf32>
    %c0_8 = arith.constant 0 : index
    %c0_9 = arith.constant 0 : index
    %c0_10 = arith.constant 0 : index
    %43 = vector.load %arg3[%c0_8, %c0_9, %c0_10] : memref<3x13x1xf32, #tpu.memory_space<vmem>>, vector<1x13x1xf32>
    %44 = vector.shape_cast %43 : vector<1x13x1xf32> to vector<13x1xf32>
    %45 = vector.broadcast %44 : vector<13x1xf32> to vector<13x17xf32>
    %46 = arith.addf %42, %45 : vector<13x17xf32>
    %c0_11 = arith.constant 0 : index
    %c0_12 = arith.constant 0 : index
    %c0_13 = arith.constant 0 : index
    %c0_14 = arith.constant 0 : index
    %47 = vector.load %arg4[%c0_11, %c0_12, %c0_13, %c0_14] : memref<1x3x13x17xf32, #tpu.memory_space<vmem>>, vector<1x1x13x17xf32>
    %48 = vector.shape_cast %47 : vector<1x1x13x17xf32> to vector<13x17xf32>
    %49 = vector.shape_cast %46 : vector<13x17xf32> to vector<1x1x13x17xf32>
    tpu.vector_store %arg4[%c0_11, %c0_12, %c0_13, %c0_14], %49 {strides = array<i32>} : memref<1x3x13x17xf32, #tpu.memory_space<vmem>>, vector<1x1x13x17xf32>,
    %c1 = arith.constant 1 : index
    %c0_15 = arith.constant 0 : index
    %c0_16 = arith.constant 0 : index
    %50 = vector.load %arg2[%c1, %c0_15, %c0_16] : memref<3x13x1xf32, #tpu.memory_space<vmem>>, vector<1x13x1xf32>
    %51 = vector.shape_cast %50 : vector<1x13x1xf32> to vector<13x1xf32>
    %52 = vector.broadcast %51 : vector<13x1xf32> to vector<13x17xf32>
    %53 = arith.mulf %38, %52 : vector<13x17xf32>
    %c1_17 = arith.constant 1 : index
    %c0_18 = arith.constant 0 : index
    %c0_19 = arith.constant 0 : index
    %54 = vector.load %arg3[%c1_17, %c0_18, %c0_19] : memref<3x13x1xf32, #tpu.memory_space<vmem>>, vector<1x13x1xf32>
    %55 = vector.shape_cast %54 : vector<1x13x1xf32> to vector<13x1xf32>
    %56 = vector.broadcast %55 : vector<13x1xf32> to vector<13x17xf32>
    %57 = arith.addf %53, %56 : vector<13x17xf32>
    %c0_20 = arith.constant 0 : index
    %c1_21 = arith.constant 1 : index
    %c0_22 = arith.constant 0 : index
    %c0_23 = arith.constant 0 : index
    %58 = vector.load %arg4[%c0_20, %c1_21, %c0_22, %c0_23] : memref<1x3x13x17xf32, #tpu.memory_space<vmem>>, vector<1x1x13x17xf32>
    %59 = vector.shape_cast %58 : vector<1x1x13x17xf32> to vector<13x17xf32>
    %60 = vector.shape_cast %57 : vector<13x17xf32> to vector<1x1x13x17xf32>
    tpu.vector_store %arg4[%c0_20, %c1_21, %c0_22, %c0_23], %60 {strides = array<i32>} : memref<1x3x13x17xf32, #tpu.memory_space<vmem>>, vector<1x1x13x17xf32>,
    %c2 = arith.constant 2 : index
    %c0_24 = arith.constant 0 : index
    %c0_25 = arith.constant 0 : index
    %61 = vector.load %arg2[%c2, %c0_24, %c0_25] : memref<3x13x1xf32, #tpu.memory_space<vmem>>, vector<1x13x1xf32>
    %62 = vector.shape_cast %61 : vector<1x13x1xf32> to vector<13x1xf32>
    %63 = vector.broadcast %62 : vector<13x1xf32> to vector<13x17xf32>
    %64 = arith.mulf %36, %63 : vector<13x17xf32>
    %c2_26 = arith.constant 2 : index
    %c0_27 = arith.constant 0 : index
    %c0_28 = arith.constant 0 : index
    %65 = vector.load %arg3[%c2_26, %c0_27, %c0_28] : memref<3x13x1xf32, #tpu.memory_space<vmem>>, vector<1x13x1xf32>
    %66 = vector.shape_cast %65 : vector<1x13x1xf32> to vector<13x1xf32>
    %67 = vector.broadcast %66 : vector<13x1xf32> to vector<13x17xf32>
    %68 = arith.addf %64, %67 : vector<13x17xf32>
    %c0_29 = arith.constant 0 : index
    %c2_30 = arith.constant 2 : index
    %c0_31 = arith.constant 0 : index
    %c0_32 = arith.constant 0 : index
    %69 = vector.load %arg4[%c0_29, %c2_30, %c0_31, %c0_32] : memref<1x3x13x17xf32, #tpu.memory_space<vmem>>, vector<1x1x13x17xf32>
    %70 = vector.shape_cast %69 : vector<1x1x13x17xf32> to vector<13x17xf32>
    %71 = vector.shape_cast %68 : vector<13x17xf32> to vector<1x1x13x17xf32>
    tpu.vector_store %arg4[%c0_29, %c2_30, %c0_31, %c0_32], %71 {strides = array<i32>} : memref<1x3x13x17xf32, #tpu.memory_space<vmem>>, vector<1x1x13x17xf32>,
    return
  }
  func.func @transform_0(%arg0: i32) -> (i32, i32, i32) {
    %c0_i32 = arith.constant 0 : i32
    %c0_i32_0 = arith.constant 0 : i32
    %c0_i32_1 = arith.constant 0 : i32
    return %arg0, %c0_i32, %c0_i32_0 : i32, i32, i32
  }
  func.func @transform_1(%arg0: i32) -> (i32, i32, i32) {
    %c0_i32 = arith.constant 0 : i32
    %c0_i32_0 = arith.constant 0 : i32
    %c0_i32_1 = arith.constant 0 : i32
    %c0_i32_2 = arith.constant 0 : i32
    return %c0_i32, %c0_i32_0, %c0_i32_1 : i32, i32, i32
  }
  func.func @transform_2(%arg0: i32) -> (i32, i32, i32) {
    %c0_i32 = arith.constant 0 : i32
    %c0_i32_0 = arith.constant 0 : i32
    %c0_i32_1 = arith.constant 0 : i32
    %c0_i32_2 = arith.constant 0 : i32
    return %c0_i32, %c0_i32_0, %c0_i32_1 : i32, i32, i32
  }
  func.func @transform_3(%arg0: i32) -> (i32, i32, i32, i32) {
    %c0_i32 = arith.constant 0 : i32
    %c0_i32_0 = arith.constant 0 : i32
    %c0_i32_1 = arith.constant 0 : i32
    %c0_i32_2 = arith.constant 0 : i32
    return %arg0, %c0_i32, %c0_i32_0, %c0_i32_1 : i32, i32, i32, i32
  }
}

</mosaic_0001>

<llo_original>
// kernel: mfcc_layer_forward.2
$region0: #{mfcc_layer_forward.2}
  #allocation0 [shape = 'u32[]', space=smem, size = 0x4, offset = 0x4, fixed_abs, tag = 'smem constant byte address 0x4 - core index']
  #allocation1 [shape = 'u32[144,128]{1,0:T(1,128)}', space=vmem, size = 0x12000, scoped, tag = 'internal scratch']
  %s0 = inlined_call_operand.vmem [shape: bf16[2,256,128], index: 0, kind: input, shape index: {}]
  %s1 = inlined_call_operand.vmem [shape: bf16[256,256], index: 1, kind: input, shape index: {}]
  %s2 = inlined_call_operand.vmem [shape: f32[128,128], index: 2, kind: input, shape index: {}]
  %s3 = inlined_call_operand.vmem [shape: f32[13,128], index: 3, kind: input, shape index: {}]
  %s4 = inlined_call_operand.vmem [shape: f32[2,13,128], index: 4, kind: output, shape index: {}]
  %s5 = sld [smem:[#allocation0]]
  $region49: #{mfcc_layer_forward.2} parent=0
    _
  %s7 = ssub.s32 1, %s5
  %s8 = scalar_select 0, %s7, %s5
  loop: start=0, step=1, limit=4
  $region2: #{mfcc_layer_forward.2} parent=0 // loop_pre_header
    _
  $region3: #{mfcc_layer_forward.2} parent=0 // loop_header
    %s10 = sphi 0, %s14
    %p11 = scmp.ge.s32.totalorder %s10, 4
    %s17 = sphi 0, %s29
    %s18 = sphi 0, %s25
    %s19 = sphi 0, %s17
    %s20 = sphi 0, %s18
    %s21 = sphi 0, %s19
    %s22 = sphi 0, %s20
    %s34 = sphi 0, %s36
    %s37 = sphi 0, %s34
    %s38 = sphi 0, %s37
    %s54 = sphi 0, %s38
    %s58 = sphi 0, %s58
    %s60 = sphi 0, %s58
    %s61 = sphi 0, %s60
    %s75 = sphi 0, %s61
    %s79 = sphi 0, %s79
    %s81 = sphi 0, %s79
    %s82 = sphi 0, %s81
    %s96 = sphi 0, %s82
    %s100 = sphi 0, %s100
    %s102 = sphi 0, %s100
    %s103 = sphi 0, %s102
    %s117 = sphi 0, %s103
    %s125 = sphi 0, %s127
    %s128 = sphi 0, %s125
    %s129 = sphi 0, %s128
    %s145 = sphi 0, %s129
  $region4: #{mfcc_layer_forward.2} parent=0 // loop_header_branch
    %13 = sbr.rel (%p11) target = $region8
  $region5: #{mfcc_layer_forward.2} parent=0 // loop_body
    %s15 = ssub.s32 %s10, 1
    %s16 = ssub.s32 %s10, 2
    %s23 = sadd.s32 1, %s18
    %p24 = scmp.ge.s32.totalorder %s23, 1
    %s25 = scalar_select %p24, 0, %s23
    %s26 = sadd.s32 1, %s17
    %s27 = scalar_select %p24, %s26, %s17
    %p28 = scmp.ge.s32.totalorder %s27, 2
    %s29 = scalar_select %p28, 0, %s27
    %s30 = ssub.s32 %s17, %s29
    %s31 = ssub.s32 %s18, %s25
    %s32 = sor.u32 %s30, %s31
    %p33 = scmp.eq.s32.totalorder %s32, 0
    %s35 = sadd.s32 %s34, 1
    %s36 = scalar_select %p33, %s34, %s35
    %p39 = pneg %p33
    %p40 = scmp.eq.s32.totalorder %s10, 1
    %p41 = por %p39, %p40
    %p42 = scmp.ne.s32.totalorder %s34, %s37
    %p43 = scmp.eq.s32.totalorder %s10, 0
    %p44 = por %p42, %p43
    %p45 = scmp.ne.s32.totalorder %s34, %s37
    %p46 = scmp.eq.s32.totalorder %s15, 1
    %p47 = por %p45, %p46
    %p48 = scmp.ne.s32.totalorder %s37, %s38
    %p49 = scmp.eq.s32.totalorder %s15, 0
    %p50 = por %p48, %p49
    %p51 = scmp.ne.s32.totalorder %s37, %s38
    %p52 = scmp.eq.s32.totalorder %s16, 1
    %p53 = por %p51, %p52
    %p55 = scmp.ne.s32.totalorder %s38, %s54
    %p56 = scmp.eq.s32.totalorder %s16, 0
    %p57 = por %p55, %p56
    %s59 = sadd.s32 %s58, 1
    %p62 = scmp.eq.s32.totalorder %s10, 1
    %p63 = scmp.ne.s32.totalorder %s58, %s60
    %p64 = scmp.eq.s32.totalorder %s10, 0
    %p65 = por %p63, %p64
    %p66 = scmp.ne.s32.totalorder %s58, %s60
    %p67 = scmp.eq.s32.totalorder %s15, 1
    %p68 = por %p66, %p67
    %p69 = scmp.ne.s32.totalorder %s60, %s61
    %p70 = scmp.eq.s32.totalorder %s15, 0
    %p71 = por %p69, %p70
    %p72 = scmp.ne.s32.totalorder %s60, %s61
    %p73 = scmp.eq.s32.totalorder %s16, 1
    %p74 = por %p72, %p73
    %p76 = scmp.ne.s32.totalorder %s61, %s75
    %p77 = scmp.eq.s32.totalorder %s16, 0
    %p78 = por %p76, %p77
    %s80 = sadd.s32 %s79, 1
    %p83 = scmp.eq.s32.totalorder %s10, 1
    %p84 = scmp.ne.s32.totalorder %s79, %s81
    %p85 = scmp.eq.s32.totalorder %s10, 0
    %p86 = por %p84, %p85
    %p87 = scmp.ne.s32.totalorder %s79, %s81
    %p88 = scmp.eq.s32.totalorder %s15, 1
    %p89 = por %p87, %p88
    %p90 = scmp.ne.s32.totalorder %s81, %s82
    %p91 = scmp.eq.s32.totalorder %s15, 0
    %p92 = por %p90, %p91
    %p93 = scmp.ne.s32.totalorder %s81, %s82
    %p94 = scmp.eq.s32.totalorder %s16, 1
    %p95 = por %p93, %p94
    %p97 = scmp.ne.s32.totalorder %s82, %s96
    %p98 = scmp.eq.s32.totalorder %s16, 0
    %p99 = por %p97, %p98
    %s101 = sadd.s32 %s100, 1
    %p104 = scmp.eq.s32.totalorder %s10, 1
    %p105 = scmp.ne.s32.totalorder %s100, %s102
    %p106 = scmp.eq.s32.totalorder %s10, 0
    %p107 = por %p105, %p106
    %p108 = scmp.ne.s32.totalorder %s100, %s102
    %p109 = scmp.eq.s32.totalorder %s15, 1
    %p110 = por %p108, %p109
    %p111 = scmp.ne.s32.totalorder %s102, %s103
    %p112 = scmp.eq.s32.totalorder %s15, 0
    %p113 = por %p111, %p112
    %p114 = scmp.ne.s32.totalorder %s102, %s103
    %p115 = scmp.eq.s32.totalorder %s16, 1
    %p116 = por %p114, %p115
    %p118 = scmp.ne.s32.totalorder %s103, %s117
    %p119 = scmp.eq.s32.totalorder %s16, 0
    %p120 = por %p118, %p119
    %s121 = ssub.s32 %s17, %s29
    %s122 = ssub.s32 %s18, %s25
    %s123 = sor.u32 %s121, %s122
    %p124 = scmp.eq.s32.totalorder %s123, 0
    %s126 = sadd.s32 %s125, 1
    %s127 = scalar_select %p124, %s125, %s126
    %p130 = pneg %p124
    %p131 = scmp.eq.s32.totalorder %s10, 1
    %p132 = por %p130, %p131
    %p133 = scmp.ne.s32.totalorder %s125, %s128
    %p134 = scmp.eq.s32.totalorder %s10, 0
    %p135 = por %p133, %p134
    %p136 = scmp.ne.s32.totalorder %s125, %s128
    %p137 = scmp.eq.s32.totalorder %s15, 1
    %p138 = por %p136, %p137
    %p139 = scmp.ne.s32.totalorder %s128, %s129
    %p140 = scmp.eq.s32.totalorder %s15, 0
    %p141 = por %p139, %p140
    %p142 = scmp.ne.s32.totalorder %s128, %s129
    %p143 = scmp.eq.s32.totalorder %s16, 1
    %p144 = por %p142, %p143
    %p146 = scmp.ne.s32.totalorder %s129, %s145
    %p147 = scmp.eq.s32.totalorder %s16, 0
    %p148 = por %p146, %p147
    %p149 = scmp.le.s32.totalorder 1, %s10
    %p150 = scmp.lt.s32.totalorder %s10, 3
    %p151 = pnand %p149, %p150
    %p152 = pneg %p151
    // Predicated region
    $region9: #{mfcc_layer_forward.2} parent=5 // pred_check
      _
    $region10: #{mfcc_layer_forward.2} parent=5 // pred_check_branch
      %154 = sbr.rel (%p151) target = $region12
    $region11: #{mfcc_layer_forward.2} parent=5 // pred_region
      %s155 = ssub.s32 %s10, 1
      // Predicated region
      $region13: #{mfcc_layer_forward.2} parent=11 // pred_check
        %p156 = pneg %p71
      $region14: #{mfcc_layer_forward.2} parent=11 // pred_check_branch
        %158 = sbr.rel (%p156) target = $region16
      $region15: #{mfcc_layer_forward.2} parent=11 // pred_region
        _
      $region16: #{mfcc_layer_forward.2} parent=11 // pred_fallthru
        _
      // Predicated region
      $region17: #{mfcc_layer_forward.2} parent=11 // pred_check
        %p159 = pneg %p92
      $region18: #{mfcc_layer_forward.2} parent=11 // pred_check_branch
        %161 = sbr.rel (%p159) target = $region20
      $region19: #{mfcc_layer_forward.2} parent=11 // pred_region
        _
      $region20: #{mfcc_layer_forward.2} parent=11 // pred_fallthru
        _
      // Predicated region
      $region21: #{mfcc_layer_forward.2} parent=11 // pred_check
        %p162 = pneg %p113
      $region22: #{mfcc_layer_forward.2} parent=11 // pred_check_branch
        %164 = sbr.rel (%p162) target = $region24
      $region23: #{mfcc_layer_forward.2} parent=11 // pred_region
        _
      $region24: #{mfcc_layer_forward.2} parent=11 // pred_fallthru
        _
    $region12: #{mfcc_layer_forward.2} parent=5 // pred_fallthru
      _
    %p165 = scmp.lt.s32.totalorder %s10, 2
    // Predicated region
    $region25: #{mfcc_layer_forward.2} parent=5 // pred_check
      %p166 = pneg %p165
    $region26: #{mfcc_layer_forward.2} parent=5 // pred_check_branch
      %168 = sbr.rel (%p166) target = $region28
    $region27: #{mfcc_layer_forward.2} parent=5 // pred_region
      // Predicated region
      $region29: #{mfcc_layer_forward.2} parent=27 // pred_check
        %p169 = pneg %p44
      $region30: #{mfcc_layer_forward.2} parent=27 // pred_check_branch
        %171 = sbr.rel (%p169) target = $region32
      $region31: #{mfcc_layer_forward.2} parent=27 // pred_region
        %p172 = scmp.lt.s32.totalorder %s17, 1
        %s173 = scalar_select %p172, %s17, 1
        %p174 = scmp.lt.s32.totalorder %s18, 0
        %s175 = scalar_select %p174, %s18, 0
        %s176 = smul.addr %s173, 32
        %s177 = sadd.s32 %s175, %s176
        %s178 = smul.addr %s177, 4
        %s179 = scalar_lea.vmem %s0, %s178
      $region32: #{mfcc_layer_forward.2} parent=27 // pred_fallthru
        _
    $region28: #{mfcc_layer_forward.2} parent=5 // pred_fallthru
      _
    %p180 = scmp.le.s32.totalorder 1, %s10
    %p181 = scmp.lt.s32.totalorder %s10, 3
    %p182 = pnand %p180, %p181
    %p183 = pneg %p182
    // Predicated region
    $region33: #{mfcc_layer_forward.2} parent=5 // pred_check
      _
    $region34: #{mfcc_layer_forward.2} parent=5 // pred_check_branch
      %185 = sbr.rel (%p182) target = $region36
    $region35: #{mfcc_layer_forward.2} parent=5 // pred_region
      %s186 = ssub.s32 %s10, 1
      %p187 = scmp.lt.s32.totalorder %s19, 1
      %s188 = scalar_select %p187, %s19, 1
      %p189 = scmp.lt.s32.totalorder %s20, 0
      %s190 = scalar_select %p189, %s20, 0
      %s191 = smul.addr %s188, 32
      %s192 = sadd.s32 %s190, %s191
      %s193 = smul.addr %s192, 4
      %s194 = scalar_lea.vmem %s0, %s193
      %p195 = pneg %p50
      %p196 = pneg %p47
      %p197 = pneg %p71
      %p198 = pneg %p68
      %p199 = pneg %p92
      %p200 = pneg %p89
      %p201 = pneg %p113
      %p202 = pneg %p110
      %p203 = pneg %p141
      %p204 = pneg %p138
      %p205 = scmp.lt.s32.totalorder %s19, 1
      %s206 = scalar_select %p205, %s19, 1
      %p207 = scmp.lt.s32.totalorder %s20, 0
      %s208 = scalar_select %p207, %s20, 0
      %s209 = smul.addr %s206, 2
      %s210 = sadd.s32 %s208, %s209
      %s211 = smul.addr %s210, 8
      %s212 = scalar_lea.vmem %s4, %s211
      %p213 = scmp.lt.s32.totalorder %s19, 1
      %s214 = scalar_select %p213, %s19, 1
      %p215 = scmp.lt.s32.totalorder %s20, 0
      %s216 = scalar_select %p215, %s20, 0
      %s217 = smul.addr %s214, 32
      %s218 = sadd.s32 %s216, %s217
      %s219 = smul.addr %s218, 4
      %s220 = scalar_lea.vmem %s0, %s219
      %p221 = scmp.lt.s32.totalorder %s19, 1
      %s222 = scalar_select %p221, %s19, 1
      %p223 = scmp.lt.s32.totalorder %s20, 0
      %s224 = scalar_select %p223, %s20, 0
      %s225 = smul.addr %s222, 2
      %s226 = sadd.s32 %s224, %s225
      %s227 = smul.addr %s226, 8
      %s228 = scalar_lea.vmem %s4, %s227
      %v230 = vld [vmem:[%s220] sm:$0xf]
      %v231 = vld [vmem:[%s220 + $0x4] sm:$0xf]
      %v232 = vld [vmem:[%s220 + $0x8] sm:$0xf]
      %v233 = vld [vmem:[%s220 + $0xc] sm:$0xf]
      %v234 = vld [vmem:[%s220 + $0x10] sm:$0xf]
      %v235 = vld [vmem:[%s220 + $0x14] sm:$0xf]
      %v236 = vld [vmem:[%s220 + $0x18] sm:$0xf]
      %v237 = vld [vmem:[%s220 + $0x1c] sm:$0xf]
      %v238 = vld [vmem:[%s220 + $0x20] sm:$0xf]
      %v239 = vld [vmem:[%s220 + $0x24] sm:$0xf]
      %v240 = vld [vmem:[%s220 + $0x28] sm:$0xf]
      %v241 = vld [vmem:[%s220 + $0x2c] sm:$0xf]
      %v242 = vld [vmem:[%s220 + $0x30] sm:$0xf]
      %v243 = vld [vmem:[%s220 + $0x34] sm:$0xf]
      %v244 = vld [vmem:[%s220 + $0x38] sm:$0xf]
      %v245 = vld [vmem:[%s220 + $0x3c] sm:$0xf]
      %v246 = vld [vmem:[%s220 + $0x40] sm:$0xf]
      %v247 = vld [vmem:[%s220 + $0x44] sm:$0xf]
      %v248 = vld [vmem:[%s220 + $0x48] sm:$0xf]
      %v249 = vld [vmem:[%s220 + $0x4c] sm:$0xf]
      %v250 = vld [vmem:[%s220 + $0x50] sm:$0xf]
      %v251 = vld [vmem:[%s220 + $0x54] sm:$0xf]
      %v252 = vld [vmem:[%s220 + $0x58] sm:$0xf]
      %v253 = vld [vmem:[%s220 + $0x5c] sm:$0xf]
      %v254 = vld [vmem:[%s220 + $0x60] sm:$0xf]
      %v255 = vld [vmem:[%s220 + $0x64] sm:$0xf]
      %v256 = vld [vmem:[%s220 + $0x68] sm:$0xf]
      %v257 = vld [vmem:[%s220 + $0x6c] sm:$0xf]
      %v258 = vld [vmem:[%s220 + $0x70] sm:$0xf]
      %v259 = vld [vmem:[%s220 + $0x74] sm:$0xf]
      %v260 = vld [vmem:[%s220 + $0x78] sm:$0xf]
      %v261 = vld [vmem:[%s220 + $0x7c] sm:$0xf]
      %v262 = vld [vmem:[%s1] sm:$0xff]
      %v263 = vld [vmem:[%s1 + $0x8] sm:$0xff]
      %v264 = vld [vmem:[%s1 + $0x10] sm:$0xff]
      %v265 = vld [vmem:[%s1 + $0x18] sm:$0xff]
      %v266 = vld [vmem:[%s1 + $0x20] sm:$0xff]
      %v267 = vld [vmem:[%s1 + $0x28] sm:$0xff]
      %v268 = vld [vmem:[%s1 + $0x30] sm:$0xff]
      %v269 = vld [vmem:[%s1 + $0x38] sm:$0xff]
      %v270 = vld [vmem:[%s1 + $0x40] sm:$0xff]
      %v271 = vld [vmem:[%s1 + $0x48] sm:$0xff]
      %v272 = vld [vmem:[%s1 + $0x50] sm:$0xff]
      %v273 = vld [vmem:[%s1 + $0x58] sm:$0xff]
      %v274 = vld [vmem:[%s1 + $0x60] sm:$0xff]
      %v275 = vld [vmem:[%s1 + $0x68] sm:$0xff]
      %v276 = vld [vmem:[%s1 + $0x70] sm:$0xff]
      %v277 = vld [vmem:[%s1 + $0x78] sm:$0xff]
      %v278 = vld [vmem:[%s1 + $0x80] sm:$0xff]
      %v279 = vld [vmem:[%s1 + $0x88] sm:$0xff]
      %v280 = vld [vmem:[%s1 + $0x90] sm:$0xff]
      %v281 = vld [vmem:[%s1 + $0x98] sm:$0xff]
      %v282 = vld [vmem:[%s1 + $0xa0] sm:$0xff]
      %v283 = vld [vmem:[%s1 + $0xa8] sm:$0xff]
      %v284 = vld [vmem:[%s1 + $0xb0] sm:$0xff]
      %v285 = vld [vmem:[%s1 + $0xb8] sm:$0xff]
      %v286 = vld [vmem:[%s1 + $0xc0] sm:$0xff]
      %v287 = vld [vmem:[%s1 + $0xc8] sm:$0xff]
      %v288 = vld [vmem:[%s1 + $0xd0] sm:$0xff]
      %v289 = vld [vmem:[%s1 + $0xd8] sm:$0xff]
      %v290 = vld [vmem:[%s1 + $0xe0] sm:$0xff]
      %v291 = vld [vmem:[%s1 + $0xe8] sm:$0xff]
      %v292 = vld [vmem:[%s1 + $0xf0] sm:$0xff]
      %v293 = vld [vmem:[%s1 + $0xf8] sm:$0xff]
      %v326 = vunpack.c.l.b16 %v262
      %v327 = vunpack.c.h.b16 %v262
      %v328 = vunpack.c.l.b16 %v263
      %v329 = vunpack.c.h.b16 %v263
      %v330 = vunpack.c.l.b16 %v264
      %v331 = vunpack.c.h.b16 %v264
      %v332 = vunpack.c.l.b16 %v265
      %v333 = vunpack.c.h.b16 %v265
      %v334 = vunpack.c.l.b16 %v266
      %v335 = vunpack.c.h.b16 %v266
      %v336 = vunpack.c.l.b16 %v267
      %v337 = vunpack.c.h.b16 %v267
      %v338 = vunpack.c.l.b16 %v268
      %v339 = vunpack.c.h.b16 %v268
      %v340 = vunpack.c.l.b16 %v269
      %v341 = vunpack.c.h.b16 %v269
      %v342 = vunpack.c.l.b16 %v270
      %v343 = vunpack.c.h.b16 %v270
      %v344 = vunpack.c.l.b16 %v271
      %v345 = vunpack.c.h.b16 %v271
      %v346 = vunpack.c.l.b16 %v272
      %v347 = vunpack.c.h.b16 %v272
      %v348 = vunpack.c.l.b16 %v273
      %v349 = vunpack.c.h.b16 %v273
      %v350 = vunpack.c.l.b16 %v274
      %v351 = vunpack.c.h.b16 %v274
      %v352 = vunpack.c.l.b16 %v275
      %v353 = vunpack.c.h.b16 %v275
      %v354 = vunpack.c.l.b16 %v276
      %v355 = vunpack.c.h.b16 %v276
      %v356 = vunpack.c.l.b16 %v277
      %v357 = vunpack.c.h.b16 %v277
      %v358 = vunpack.c.l.b16 %v278
      %v359 = vunpack.c.h.b16 %v278
      %v360 = vunpack.c.l.b16 %v279
      %v361 = vunpack.c.h.b16 %v279
      %v362 = vunpack.c.l.b16 %v280
      %v363 = vunpack.c.h.b16 %v280
      %v364 = vunpack.c.l.b16 %v281
      %v365 = vunpack.c.h.b16 %v281
      %v366 = vunpack.c.l.b16 %v282
      %v367 = vunpack.c.h.b16 %v282
      %v368 = vunpack.c.l.b16 %v283
      %v369 = vunpack.c.h.b16 %v283
      %v370 = vunpack.c.l.b16 %v284
      %v371 = vunpack.c.h.b16 %v284
      %v372 = vunpack.c.l.b16 %v285
      %v373 = vunpack.c.h.b16 %v285
      %v374 = vunpack.c.l.b16 %v286
      %v375 = vunpack.c.h.b16 %v286
      %v376 = vunpack.c.l.b16 %v287
      %v377 = vunpack.c.h.b16 %v287
      %v378 = vunpack.c.l.b16 %v288
      %v379 = vunpack.c.h.b16 %v288
      %v380 = vunpack.c.l.b16 %v289
      %v381 = vunpack.c.h.b16 %v289
      %v382 = vunpack.c.l.b16 %v290
      %v383 = vunpack.c.h.b16 %v290
      %v384 = vunpack.c.l.b16 %v291
      %v385 = vunpack.c.h.b16 %v291
      %v386 = vunpack.c.l.b16 %v292
      %v387 = vunpack.c.h.b16 %v292
      %v388 = vunpack.c.l.b16 %v293
      %v389 = vunpack.c.h.b16 %v293
      %v390 = vpack.c.b16 %v328, %v326
      %v391 = vpack.c.b16 %v329, %v327
      %v392 = vpack.c.b16 %v332, %v330
      %v393 = vpack.c.b16 %v333, %v331
      %v394 = vpack.c.b16 %v336, %v334
      %v395 = vpack.c.b16 %v337, %v335
      %v396 = vpack.c.b16 %v340, %v338
      %v397 = vpack.c.b16 %v341, %v339
      %v398 = vpack.c.b16 %v344, %v342
      %v399 = vpack.c.b16 %v345, %v343
      %v400 = vpack.c.b16 %v348, %v346
      %v401 = vpack.c.b16 %v349, %v347
      %v402 = vpack.c.b16 %v352, %v350
      %v403 = vpack.c.b16 %v353, %v351
      %v404 = vpack.c.b16 %v356, %v354
      %v405 = vpack.c.b16 %v357, %v355
      %v406 = vpack.c.b16 %v360, %v358
      %v407 = vpack.c.b16 %v361, %v359
      %v408 = vpack.c.b16 %v364, %v362
      %v409 = vpack.c.b16 %v365, %v363
      %v410 = vpack.c.b16 %v368, %v366
      %v411 = vpack.c.b16 %v369, %v367
      %v412 = vpack.c.b16 %v372, %v370
      %v413 = vpack.c.b16 %v373, %v371
      %v414 = vpack.c.b16 %v376, %v374
      %v415 = vpack.c.b16 %v377, %v375
      %v416 = vpack.c.b16 %v380, %v378
      %v417 = vpack.c.b16 %v381, %v379
      %v418 = vpack.c.b16 %v384, %v382
      %v419 = vpack.c.b16 %v385, %v383
      %v420 = vpack.c.b16 %v388, %v386
      %v421 = vpack.c.b16 %v389, %v387
      %v486 = vunpack.c.l.b16 %v230
      %v487 = vunpack.c.l.b16 %v231
      %v488 = vunpack.c.l.b16 %v232
      %v489 = vunpack.c.l.b16 %v233
      %v490 = vunpack.c.l.b16 %v234
      %v491 = vunpack.c.l.b16 %v235
      %v492 = vunpack.c.l.b16 %v236
      %v493 = vunpack.c.l.b16 %v237
      %v494 = vunpack.c.l.b16 %v238
      %v495 = vunpack.c.l.b16 %v239
      %v496 = vunpack.c.l.b16 %v240
      %v497 = vunpack.c.l.b16 %v241
      %v498 = vunpack.c.l.b16 %v242
      %v499 = vunpack.c.l.b16 %v243
      %v500 = vunpack.c.l.b16 %v244
      %v501 = vunpack.c.l.b16 %v245
      %v502 = vunpack.c.l.b16 %v246
      %v503 = vunpack.c.l.b16 %v247
      %v504 = vunpack.c.l.b16 %v248
      %v505 = vunpack.c.l.b16 %v249
      %v506 = vunpack.c.l.b16 %v250
      %v507 = vunpack.c.l.b16 %v251
      %v508 = vunpack.c.l.b16 %v252
      %v509 = vunpack.c.l.b16 %v253
      %v510 = vunpack.c.l.b16 %v254
      %v511 = vunpack.c.l.b16 %v255
      %v512 = vunpack.c.l.b16 %v256
      %v513 = vunpack.c.l.b16 %v257
      %v514 = vunpack.c.l.b16 %v258
      %v515 = vunpack.c.l.b16 %v259
      %v516 = vunpack.c.l.b16 %v260
      %v517 = vunpack.c.l.b16 %v261
      %v518 = vpack.c.b16 %v487, %v486
      %v519 = vpack.c.b16 %v489, %v488
      %v520 = vpack.c.b16 %v491, %v490
      %v521 = vpack.c.b16 %v493, %v492
      %v522 = vpack.c.b16 %v495, %v494
      %v523 = vpack.c.b16 %v497, %v496
      %v524 = vpack.c.b16 %v499, %v498
      %v525 = vpack.c.b16 %v501, %v500
      %v526 = vpack.c.b16 %v503, %v502
      %v527 = vpack.c.b16 %v505, %v504
      %v528 = vpack.c.b16 %v507, %v506
      %v529 = vpack.c.b16 %v509, %v508
      %v530 = vpack.c.b16 %v511, %v510
      %v531 = vpack.c.b16 %v513, %v512
      %v532 = vpack.c.b16 %v515, %v514
      %v533 = vpack.c.b16 %v517, %v516
      %550 = vmatprep.subr.bf16.mxu0 0
      %551 = vmatpush1.bf16.msra.mxu0 %v518
      %552 = vmatprep.subr.bf16.mxu0 0
      %553 = vmatpush1.bf16.msra.mxu0 %v519
      %554 = vmatprep.subr.bf16.mxu0 0
      %555 = vmatpush1.bf16.msra.mxu0 %v520
      %556 = vmatprep.subr.bf16.mxu0 0
      %557 = vmatpush1.bf16.msra.mxu0 %v521
      %558 = vmatprep.subr.bf16.mxu0 0
      %559 = vmatpush1.bf16.msra.mxu0 %v522
      %560 = vmatprep.subr.bf16.mxu0 0
      %561 = vmatpush1.bf16.msra.mxu0 %v523
      %562 = vmatprep.subr.bf16.mxu0 0
      %563 = vmatpush1.bf16.msra.mxu0 %v524
      %564 = vmatprep.subr.bf16.mxu0 0
      %565 = vmatpush1.bf16.msra.mxu0 %v525
      %566 = vmatprep.subr.bf16.mxu0 0
      %567 = vmatpush1.bf16.msra.mxu0 %v526
      %568 = vmatprep.subr.bf16.mxu0 0
      %569 = vmatpush1.bf16.msra.mxu0 %v527
      %570 = vmatprep.subr.bf16.mxu0 0
      %571 = vmatpush1.bf16.msra.mxu0 %v528
      %572 = vmatprep.subr.bf16.mxu0 0
      %573 = vmatpush1.bf16.msra.mxu0 %v529
      %574 = vmatprep.subr.bf16.mxu0 0
      %575 = vmatpush1.bf16.msra.mxu0 %v530
      %576 = vmatprep.subr.bf16.mxu0 0
      %577 = vmatpush1.bf16.msra.mxu0 %v531
      %578 = vmatprep.subr.bf16.mxu0 0
      %579 = vmatpush1.bf16.msra.mxu0 %v532
      %580 = vmatprep.subr.bf16.mxu0 0
      %581 = vmatpush1.bf16.msra.mxu0 %v533
      %582 = vmatprep.mubr.bf16.mxu0 %v391
      %583 = vmatmul.mubr.bf16.gmra.mrb[0].mxu0 %v390
      %v584 = vpop.f32.mrb[0].mxu0
      %v585 = vadd.f32 0.0, %v584
      %v586 = vpop.f32.mrb[0].mxu0
      %v587 = vpop.f32.mrb[0].mxu0
      %v588 = vadd.f32 0.0, %v587
      %v589 = vpop.f32.mrb[0].mxu0
      %590 = vmatprep.mubr.bf16.mxu0 %v393
      %591 = vmatmul.mubr.bf16.gmra.mrb[0].mxu0 %v392
      %v592 = vpop.f32.mrb[0].mxu0
      %v593 = vadd.f32 0.0, %v592
      %v594 = vpop.f32.mrb[0].mxu0
      %v595 = vpop.f32.mrb[0].mxu0
      %v596 = vadd.f32 0.0, %v595
      %v597 = vpop.f32.mrb[0].mxu0
      %598 = vmatprep.mubr.bf16.mxu0 %v395
      %599 = vmatmul.mubr.bf16.gmra.mrb[0].mxu0 %v394
      %v600 = vpop.f32.mrb[0].mxu0
      %v601 = vadd.f32 0.0, %v600
      %v602 = vpop.f32.mrb[0].mxu0
      %v603 = vpop.f32.mrb[0].mxu0
      %v604 = vadd.f32 0.0, %v603
      %v605 = vpop.f32.mrb[0].mxu0
      %606 = vmatprep.mubr.bf16.mxu0 %v397
      %607 = vmatmul.mubr.bf16.gmra.mrb[0].mxu0 %v396
      %v608 = vpop.f32.mrb[0].mxu0
      %v609 = vadd.f32 0.0, %v608
      %v610 = vpop.f32.mrb[0].mxu0
      %v611 = vpop.f32.mrb[0].mxu0
      %v612 = vadd.f32 0.0, %v611
      %v613 = vpop.f32.mrb[0].mxu0
      %614 = vmatprep.mubr.bf16.mxu0 %v399
      %615 = vmatmul.mubr.bf16.gmra.mrb[0].mxu0 %v398
      %v616 = vpop.f32.mrb[0].mxu0
      %v617 = vadd.f32 0.0, %v616
      %v618 = vpop.f32.mrb[0].mxu0
      %v619 = vpop.f32.mrb[0].mxu0
      %v620 = vadd.f32 0.0, %v619
      %v621 = vpop.f32.mrb[0].mxu0
      %622 = vmatprep.mubr.bf16.mxu0 %v401
      %623 = vmatmul.mubr.bf16.gmra.mrb[0].mxu0 %v400
      %v624 = vpop.f32.mrb[0].mxu0
      %v625 = vadd.f32 0.0, %v624
      %v626 = vpop.f32.mrb[0].mxu0
      %v627 = vpop.f32.mrb[0].mxu0
      %v628 = vadd.f32 0.0, %v627
      %v629 = vpop.f32.mrb[0].mxu0
      %630 = vmatprep.mubr.bf16.mxu0 %v403
      %631 = vmatmul.mubr.bf16.gmra.mrb[0].mxu0 %v402
      %v632 = vpop.f32.mrb[0].mxu0
      %v633 = vadd.f32 0.0, %v632
      %v634 = vpop.f32.mrb[0].mxu0
      %v635 = vpop.f32.mrb[0].mxu0
      %v636 = vadd.f32 0.0, %v635
      %v637 = vpop.f32.mrb[0].mxu0
      %638 = vmatprep.mubr.bf16.mxu0 %v405
      %639 = vmatmul.mubr.bf16.gmra.mrb[0].mxu0 %v404
      %v640 = vpop.f32.mrb[0].mxu0
      %v641 = vadd.f32 0.0, %v640
      %v642 = vpop.f32.mrb[0].mxu0
      %v643 = vpop.f32.mrb[0].mxu0
      %v644 = vadd.f32 0.0, %v643
      %v645 = vpop.f32.mrb[0].mxu0
      %646 = vmatprep.mubr.bf16.mxu0 %v407
      %647 = vmatmul.mubr.bf16.gmra.mrb[0].mxu0 %v406
      %v648 = vpop.f32.mrb[0].mxu0
      %v649 = vadd.f32 0.0, %v648
      %v650 = vpop.f32.mrb[0].mxu0
      %v651 = vpop.f32.mrb[0].mxu0
      %v652 = vadd.f32 0.0, %v651
      %v653 = vpop.f32.mrb[0].mxu0
      %654 = vmatprep.mubr.bf16.mxu0 %v409
      %655 = vmatmul.mubr.bf16.gmra.mrb[0].mxu0 %v408
      %v656 = vpop.f32.mrb[0].mxu0
      %v657 = vadd.f32 0.0, %v656
      %v658 = vpop.f32.mrb[0].mxu0
      %v659 = vpop.f32.mrb[0].mxu0
      %v660 = vadd.f32 0.0, %v659
      %v661 = vpop.f32.mrb[0].mxu0
      %662 = vmatprep.mubr.bf16.mxu0 %v411
      %663 = vmatmul.mubr.bf16.gmra.mrb[0].mxu0 %v410
      %v664 = vpop.f32.mrb[0].mxu0
      %v665 = vadd.f32 0.0, %v664
      %v666 = vpop.f32.mrb[0].mxu0
      %v667 = vpop.f32.mrb[0].mxu0
      %v668 = vadd.f32 0.0, %v667
      %v669 = vpop.f32.mrb[0].mxu0
      %670 = vmatprep.mubr.bf16.mxu0 %v413
      %671 = vmatmul.mubr.bf16.gmra.mrb[0].mxu0 %v412
      %v672 = vpop.f32.mrb[0].mxu0
      %v673 = vadd.f32 0.0, %v672
      %v674 = vpop.f32.mrb[0].mxu0
      %v675 = vpop.f32.mrb[0].mxu0
      %v676 = vadd.f32 0.0, %v675
      %v677 = vpop.f32.mrb[0].mxu0
      %678 = vmatprep.mubr.bf16.mxu0 %v415
      %679 = vmatmul.mubr.bf16.gmra.mrb[0].mxu0 %v414
      %v680 = vpop.f32.mrb[0].mxu0
      %v681 = vadd.f32 0.0, %v680
      %v682 = vpop.f32.mrb[0].mxu0
      %v683 = vpop.f32.mrb[0].mxu0
      %v684 = vadd.f32 0.0, %v683
      %v685 = vpop.f32.mrb[0].mxu0
      %686 = vmatprep.mubr.bf16.mxu0 %v417
      %687 = vmatmul.mubr.bf16.gmra.mrb[0].mxu0 %v416
      %v688 = vpop.f32.mrb[0].mxu0
      %v689 = vadd.f32 0.0, %v688
      %v690 = vpop.f32.mrb[0].mxu0
      %v691 = vpop.f32.mrb[0].mxu0
      %v692 = vadd.f32 0.0, %v691
      %v693 = vpop.f32.mrb[0].mxu0
      %694 = vmatprep.mubr.bf16.mxu0 %v419
      %695 = vmatmul.mubr.bf16.gmra.mrb[0].mxu0 %v418
      %v696 = vpop.f32.mrb[0].mxu0
      %v697 = vadd.f32 0.0, %v696
      %v698 = vpop.f32.mrb[0].mxu0
      %v699 = vpop.f32.mrb[0].mxu0
      %v700 = vadd.f32 0.0, %v699
      %v701 = vpop.f32.mrb[0].mxu0
      %702 = vmatprep.mubr.bf16.mxu0 %v421
      %703 = vmatmul.mubr.bf16.gmra.mrb[0].mxu0 %v420
      %v704 = vpop.f32.mrb[0].mxu0
      %v705 = vadd.f32 0.0, %v704
      %v706 = vpop.f32.mrb[0].mxu0
      %v707 = vpop.f32.mrb[0].mxu0
      %v708 = vadd.f32 0.0, %v707
      %v709 = vpop.f32.mrb[0].mxu0
      %710 = vdwg.mxu0
      %v711 = vmul.f32 %v585, %v585
      %v712 = vmul.f32 %v588, %v588
      %v713 = vmul.f32 %v593, %v593
      %v714 = vmul.f32 %v596, %v596
      %v715 = vmul.f32 %v601, %v601
      %v716 = vmul.f32 %v604, %v604
      %v717 = vmul.f32 %v609, %v609
      %v718 = vmul.f32 %v612, %v612
      %v719 = vmul.f32 %v617, %v617
      %v720 = vmul.f32 %v620, %v620
      %v721 = vmul.f32 %v625, %v625
      %v722 = vmul.f32 %v628, %v628
      %v723 = vmul.f32 %v633, %v633
      %v724 = vmul.f32 %v636, %v636
      %v725 = vmul.f32 %v641, %v641
      %v726 = vmul.f32 %v644, %v644
      %v727 = vmul.f32 %v649, %v649
      %v728 = vmul.f32 %v652, %v652
      %v729 = vmul.f32 %v657, %v657
      %v730 = vmul.f32 %v660, %v660
      %v731 = vmul.f32 %v665, %v665
      %v732 = vmul.f32 %v668, %v668
      %v733 = vmul.f32 %v673, %v673
      %v734 = vmul.f32 %v676, %v676
      %v735 = vmul.f32 %v681, %v681
      %v736 = vmul.f32 %v684, %v684
      %v737 = vmul.f32 %v689, %v689
      %v738 = vmul.f32 %v692, %v692
      %v739 = vmul.f32 %v697, %v697
      %v740 = vmul.f32 %v700, %v700
      %v741 = vmul.f32 %v705, %v705
      %v742 = vmul.f32 %v708, %v708
      %v743 = vadd.f32 %v711, %v727
      %v744 = vadd.f32 %v712, %v728
      %v745 = vadd.f32 %v713, %v729
      %v746 = vadd.f32 %v714, %v730
      %v747 = vadd.f32 %v715, %v731
      %v748 = vadd.f32 %v716, %v732
      %v749 = vadd.f32 %v717, %v733
      %v750 = vadd.f32 %v718, %v734
      %v751 = vadd.f32 %v719, %v735
      %v752 = vadd.f32 %v720, %v736
      %v753 = vadd.f32 %v721, %v737
      %v754 = vadd.f32 %v722, %v738
      %v755 = vadd.f32 %v723, %v739
      %v756 = vadd.f32 %v724, %v740
      %v757 = vadd.f32 %v725, %v741
      %v758 = vadd.f32 %v726, %v742
      %v759 = vld [vmem:[%s2] sm:$0xff]
      %v760 = vld [vmem:[%s2 + $0x8] sm:$0xff]
      %v761 = vld [vmem:[%s2 + $0x10] sm:$0xff]
      %v762 = vld [vmem:[%s2 + $0x18] sm:$0xff]
      %v763 = vld [vmem:[%s2 + $0x20] sm:$0xff]
      %v764 = vld [vmem:[%s2 + $0x28] sm:$0xff]
      %v765 = vld [vmem:[%s2 + $0x30] sm:$0xff]
      %v766 = vld [vmem:[%s2 + $0x38] sm:$0xff]
      %v767 = vld [vmem:[%s2 + $0x40] sm:$0xff]
      %v768 = vld [vmem:[%s2 + $0x48] sm:$0xff]
      %v769 = vld [vmem:[%s2 + $0x50] sm:$0xff]
      %v770 = vld [vmem:[%s2 + $0x58] sm:$0xff]
      %v771 = vld [vmem:[%s2 + $0x60] sm:$0xff]
      %v772 = vld [vmem:[%s2 + $0x68] sm:$0xff]
      %v773 = vld [vmem:[%s2 + $0x70] sm:$0xff]
      %v774 = vld [vmem:[%s2 + $0x78] sm:$0xff]
      %775 = vmatprep.subr.mxu0 0.0
      %776 = vmatpush1.msra.mxu0 %v743
      %777 = vmatprep.subr.mxu0 0.0
      %778 = vmatpush1.msra.mxu0 %v744
      %779 = vmatprep.subr.mxu0 0.0
      %780 = vmatpush1.msra.mxu0 %v745
      %781 = vmatprep.subr.mxu0 0.0
      %782 = vmatpush1.msra.mxu0 %v746
      %783 = vmatprep.subr.mxu0 0.0
      %784 = vmatpush1.msra.mxu0 %v747
      %785 = vmatprep.subr.mxu0 0.0
      %786 = vmatpush1.msra.mxu0 %v748
      %787 = vmatprep.subr.mxu0 0.0
      %788 = vmatpush1.msra.mxu0 %v749
      %789 = vmatprep.subr.mxu0 0.0
      %790 = vmatpush1.msra.mxu0 %v750
      %791 = vmatprep.subr.mxu0 0.0
      %792 = vmatpush1.msra.mxu0 %v751
      %793 = vmatprep.subr.mxu0 0.0
      %794 = vmatpush1.msra.mxu0 %v752
      %795 = vmatprep.subr.mxu0 0.0
      %796 = vmatpush1.msra.mxu0 %v753
      %797 = vmatprep.subr.mxu0 0.0
      %798 = vmatpush1.msra.mxu0 %v754
      %799 = vmatprep.subr.mxu0 0.0
      %800 = vmatpush1.msra.mxu0 %v755
      %801 = vmatprep.subr.mxu0 0.0
      %802 = vmatpush1.msra.mxu0 %v756
      %803 = vmatprep.subr.mxu0 0.0
      %804 = vmatpush1.msra.mxu0 %v757
      %805 = vmatprep.subr.mxu0 0.0
      %806 = vmatpush1.msra.mxu0 %v758
      %807 = vmatprep.subr.mxu0 0.0
      %808 = vmatpush1.msra.mxu0 0.0
      %809 = vmatprep.subr.mxu0 0.0
      %810 = vmatpush1.msra.mxu0 0.0
      %811 = vmatprep.subr.mxu0 0.0
      %812 = vmatpush1.msra.mxu0 0.0
      %813 = vmatprep.subr.mxu0 0.0
      %814 = vmatpush1.msra.mxu0 0.0
      %815 = vmatprep.subr.mxu0 0.0
      %816 = vmatpush1.msra.mxu0 0.0
      %817 = vmatprep.subr.mxu0 0.0
      %818 = vmatpush1.msra.mxu0 0.0
      %819 = vmatprep.subr.mxu0 0.0
      %820 = vmatpush1.msra.mxu0 0.0
      %821 = vmatprep.subr.mxu0 0.0
      %822 = vmatpush1.msra.mxu0 0.0
      %823 = vmatprep.subr.mxu0 0.0
      %824 = vmatpush1.msra.mxu0 0.0
      %825 = vmatprep.subr.mxu0 0.0
      %826 = vmatpush1.msra.mxu0 0.0
      %827 = vmatprep.subr.mxu0 0.0
      %828 = vmatpush1.msra.mxu0 0.0
      %829 = vmatprep.subr.mxu0 0.0
      %830 = vmatpush1.msra.mxu0 0.0
      %831 = vmatprep.subr.mxu0 0.0
      %832 = vmatpush1.msra.mxu0 0.0
      %833 = vmatprep.subr.mxu0 0.0
      %834 = vmatpush1.msra.mxu0 0.0
      %835 = vmatprep.subr.mxu0 0.0
      %836 = vmatpush1.msra.mxu0 0.0
      %837 = vmatprep.subr.mxu0 0.0
      %838 = vmatpush1.msra.mxu0 0.0
      %839 = vmatprep.mubr.f32.mxu0 0.0
      %840 = vmatmul.mubr.f32.gmra.mrb[0].mxu0 %v759
      %v841 = vpop.f32.mrb[0].mxu0
      %v842 = vadd.f32 0.0, %v841
      %v843 = vpop.f32.mrb[0].mxu0
      %844 = vmatprep.mubr.f32.mxu0 0.0
      %845 = vmatmul.mubr.f32.gmra.mrb[0].mxu0 %v760
      %v846 = vpop.f32.mrb[0].mxu0
      %v847 = vadd.f32 0.0, %v846
      %v848 = vpop.f32.mrb[0].mxu0
      %849 = vmatprep.mubr.f32.mxu0 0.0
      %850 = vmatmul.mubr.f32.gmra.mrb[0].mxu0 %v761
      %v851 = vpop.f32.mrb[0].mxu0
      %v852 = vadd.f32 0.0, %v851
      %v853 = vpop.f32.mrb[0].mxu0
      %854 = vmatprep.mubr.f32.mxu0 0.0
      %855 = vmatmul.mubr.f32.gmra.mrb[0].mxu0 %v762
      %v856 = vpop.f32.mrb[0].mxu0
      %v857 = vadd.f32 0.0, %v856
      %v858 = vpop.f32.mrb[0].mxu0
      %859 = vmatprep.mubr.f32.mxu0 0.0
      %860 = vmatmul.mubr.f32.gmra.mrb[0].mxu0 %v763
      %v861 = vpop.f32.mrb[0].mxu0
      %v862 = vadd.f32 0.0, %v861
      %v863 = vpop.f32.mrb[0].mxu0
      %864 = vmatprep.mubr.f32.mxu0 0.0
      %865 = vmatmul.mubr.f32.gmra.mrb[0].mxu0 %v764
      %v866 = vpop.f32.mrb[0].mxu0
      %v867 = vadd.f32 0.0, %v866
      %v868 = vpop.f32.mrb[0].mxu0
      %869 = vmatprep.mubr.f32.mxu0 0.0
      %870 = vmatmul.mubr.f32.gmra.mrb[0].mxu0 %v765
      %v871 = vpop.f32.mrb[0].mxu0
      %v872 = vadd.f32 0.0, %v871
      %v873 = vpop.f32.mrb[0].mxu0
      %874 = vmatprep.mubr.f32.mxu0 0.0
      %875 = vmatmul.mubr.f32.gmra.mrb[0].mxu0 %v766
      %v876 = vpop.f32.mrb[0].mxu0
      %v877 = vadd.f32 0.0, %v876
      %v878 = vpop.f32.mrb[0].mxu0
      %879 = vmatprep.mubr.f32.mxu0 0.0
      %880 = vmatmul.mubr.f32.gmra.mrb[0].mxu0 %v767
      %v881 = vpop.f32.mrb[0].mxu0
      %v882 = vadd.f32 0.0, %v881
      %v883 = vpop.f32.mrb[0].mxu0
      %884 = vmatprep.mubr.f32.mxu0 0.0
      %885 = vmatmul.mubr.f32.gmra.mrb[0].mxu0 %v768
      %v886 = vpop.f32.mrb[0].mxu0
      %v887 = vadd.f32 0.0, %v886
      %v888 = vpop.f32.mrb[0].mxu0
      %889 = vmatprep.mubr.f32.mxu0 0.0
      %890 = vmatmul.mubr.f32.gmra.mrb[0].mxu0 %v769
      %v891 = vpop.f32.mrb[0].mxu0
      %v892 = vadd.f32 0.0, %v891
      %v893 = vpop.f32.mrb[0].mxu0
      %894 = vmatprep.mubr.f32.mxu0 0.0
      %895 = vmatmul.mubr.f32.gmra.mrb[0].mxu0 %v770
      %v896 = vpop.f32.mrb[0].mxu0
      %v897 = vadd.f32 0.0, %v896
      %v898 = vpop.f32.mrb[0].mxu0
      %899 = vmatprep.mubr.f32.mxu0 0.0
      %900 = vmatmul.mubr.f32.gmra.mrb[0].mxu0 %v771
      %v901 = vpop.f32.mrb[0].mxu0
      %v902 = vadd.f32 0.0, %v901
      %v903 = vpop.f32.mrb[0].mxu0
      %904 = vmatprep.mubr.f32.mxu0 0.0
      %905 = vmatmul.mubr.f32.gmra.mrb[0].mxu0 %v772
      %v906 = vpop.f32.mrb[0].mxu0
      %v907 = vadd.f32 0.0, %v906
      %v908 = vpop.f32.mrb[0].mxu0
      %909 = vmatprep.mubr.f32.mxu0 0.0
      %910 = vmatmul.mubr.f32.gmra.mrb[0].mxu0 %v773
      %v911 = vpop.f32.mrb[0].mxu0
      %v912 = vadd.f32 0.0, %v911
      %v913 = vpop.f32.mrb[0].mxu0
      %914 = vmatprep.mubr.f32.mxu0 0.0
      %915 = vmatmul.mubr.f32.gmra.mrb[0].mxu0 %v774
      %v916 = vpop.f32.mrb[0].mxu0
      %v917 = vadd.f32 0.0, %v916
      %v918 = vpop.f32.mrb[0].mxu0
      %919 = vdwg.mxu0
      %v920 = vmax.f32 %v842, 1e-10
      %v921 = vmax.f32 %v847, 1e-10
      %v922 = vmax.f32 %v852, 1e-10
      %v923 = vmax.f32 %v857, 1e-10
      %v924 = vmax.f32 %v862, 1e-10
      %v925 = vmax.f32 %v867, 1e-10
      %v926 = vmax.f32 %v872, 1e-10
      %v927 = vmax.f32 %v877, 1e-10
      %v928 = vmax.f32 %v882, 1e-10
      %v929 = vmax.f32 %v887, 1e-10
      %v930 = vmax.f32 %v892, 1e-10
      %v931 = vmax.f32 %v897, 1e-10
      %v932 = vmax.f32 %v902, 1e-10
      %v933 = vmax.f32 %v907, 1e-10
      %v934 = vmax.f32 %v912, 1e-10
      %v935 = vmax.f32 %v917, 1e-10
      %v936 = vlog2.pop %v920
      %v937 = vmul.f32 %v936, 0.6931472
      %v938 = vlog2.pop %v921
      %v939 = vmul.f32 %v938, 0.6931472
      %v940 = vlog2.pop %v922
      %v941 = vmul.f32 %v940, 0.6931472
      %v942 = vlog2.pop %v923
      %v943 = vmul.f32 %v942, 0.6931472
      %v944 = vlog2.pop %v924
      %v945 = vmul.f32 %v944, 0.6931472
      %v946 = vlog2.pop %v925
      %v947 = vmul.f32 %v946, 0.6931472
      %v948 = vlog2.pop %v926
      %v949 = vmul.f32 %v948, 0.6931472
      %v950 = vlog2.pop %v927
      %v951 = vmul.f32 %v950, 0.6931472
      %v952 = vlog2.pop %v928
      %v953 = vmul.f32 %v952, 0.6931472
      %v954 = vlog2.pop %v929
      %v955 = vmul.f32 %v954, 0.6931472
      %v956 = vlog2.pop %v930
      %v957 = vmul.f32 %v956, 0.6931472
      %v958 = vlog2.pop %v931
      %v959 = vmul.f32 %v958, 0.6931472
      %v960 = vlog2.pop %v932
      %v961 = vmul.f32 %v960, 0.6931472
      %v962 = vlog2.pop %v933
      %v963 = vmul.f32 %v962, 0.6931472
      %v964 = vlog2.pop %v934
      %v965 = vmul.f32 %v964, 0.6931472
      %v966 = vlog2.pop %v935
      %v967 = vmul.f32 %v966, 0.6931472
      %v968 = vld [vmem:[%s3] sm:$0xff]
      %v969 = vld [vmem:[%s3 + $0x8] sm:$0x1f]
      %970 = vmatprep.subr.mxu0 0.0
      %971 = vmatpush1.msra.mxu0 %v937
      %972 = vmatprep.subr.mxu0 0.0
      %973 = vmatpush1.msra.mxu0 %v939
      %974 = vmatprep.subr.mxu0 0.0
      %975 = vmatpush1.msra.mxu0 %v941
      %976 = vmatprep.subr.mxu0 0.0
      %977 = vmatpush1.msra.mxu0 %v943
      %978 = vmatprep.subr.mxu0 0.0
      %979 = vmatpush1.msra.mxu0 %v945
      %980 = vmatprep.subr.mxu0 0.0
      %981 = vmatpush1.msra.mxu0 %v947
      %982 = vmatprep.subr.mxu0 0.0
      %983 = vmatpush1.msra.mxu0 %v949
      %984 = vmatprep.subr.mxu0 0.0
      %985 = vmatpush1.msra.mxu0 %v951
      %986 = vmatprep.subr.mxu0 0.0
      %987 = vmatpush1.msra.mxu0 %v953
      %988 = vmatprep.subr.mxu0 0.0
      %989 = vmatpush1.msra.mxu0 %v955
      %990 = vmatprep.subr.mxu0 0.0
      %991 = vmatpush1.msra.mxu0 %v957
      %992 = vmatprep.subr.mxu0 0.0
      %993 = vmatpush1.msra.mxu0 %v959
      %994 = vmatprep.subr.mxu0 0.0
      %995 = vmatpush1.msra.mxu0 %v961
      %996 = vmatprep.subr.mxu0 0.0
      %997 = vmatpush1.msra.mxu0 %v963
      %998 = vmatprep.subr.mxu0 0.0
      %999 = vmatpush1.msra.mxu0 %v965
      %1000 = vmatprep.subr.mxu0 0.0
      %1001 = vmatpush1.msra.mxu0 %v967
      %1002 = vmatprep.subr.mxu0 0.0
      %1003 = vmatpush1.msra.mxu0 0.0
      %1004 = vmatprep.subr.mxu0 0.0
      %1005 = vmatpush1.msra.mxu0 0.0
      %1006 = vmatprep.subr.mxu0 0.0
      %1007 = vmatpush1.msra.mxu0 0.0
      %1008 = vmatprep.subr.mxu0 0.0
      %1009 = vmatpush1.msra.mxu0 0.0
      %1010 = vmatprep.subr.mxu0 0.0
      %1011 = vmatpush1.msra.mxu0 0.0
      %1012 = vmatprep.subr.mxu0 0.0
      %1013 = vmatpush1.msra.mxu0 0.0
      %1014 = vmatprep.subr.mxu0 0.0
      %1015 = vmatpush1.msra.mxu0 0.0
      %1016 = vmatprep.subr.mxu0 0.0
      %1017 = vmatpush1.msra.mxu0 0.0
      %1018 = vmatprep.subr.mxu0 0.0
      %1019 = vmatpush1.msra.mxu0 0.0
      %1020 = vmatprep.subr.mxu0 0.0
      %1021 = vmatpush1.msra.mxu0 0.0
      %1022 = vmatprep.subr.mxu0 0.0
      %1023 = vmatpush1.msra.mxu0 0.0
      %1024 = vmatprep.subr.mxu0 0.0
      %1025 = vmatpush1.msra.mxu0 0.0
      %1026 = vmatprep.subr.mxu0 0.0
      %1027 = vmatpush1.msra.mxu0 0.0
      %1028 = vmatprep.subr.mxu0 0.0
      %1029 = vmatpush1.msra.mxu0 0.0
      %1030 = vmatprep.subr.mxu0 0.0
      %1031 = vmatpush1.msra.mxu0 0.0
      %1032 = vmatprep.subr.mxu0 0.0
      %1033 = vmatpush1.msra.mxu0 0.0
      %1034 = vmatprep.mubr.f32.mxu0 0.0
      %1035 = vmatmul.mubr.f32.gmra.mrb[0].mxu0 %v968
      %v1036 = vpop.f32.mrb[0].mxu0
      %v1037 = vadd.f32 0.0, %v1036
      %v1038 = vpop.f32.mrb[0].mxu0
      %1039 = vmatprep.mubr.f32.mxu0 0.0
      %1040 = vmatmul.mubr.f32.gmra.mrb[0].mxu0 %v969
      %v1041 = vpop.f32.mrb[0].mxu0
      %v1042 = vadd.f32 0.0, %v1041
      %v1043 = vpop.f32.mrb[0].mxu0
      %1044 = vdwg.mxu0
      %1045 = vst [vmem:[%s228] sm:$0xff] %v1037
      %1046 = vst [vmem:[%s228 + $0x8] sm:$0x1f] %v1042
      %p1047 = scmp.lt.s32.totalorder %s19, 1
      %s1048 = scalar_select %p1047, %s19, 1
      %p1049 = scmp.lt.s32.totalorder %s20, 0
      %s1050 = scalar_select %p1049, %s20, 0
      %s1051 = smul.addr %s1048, 2
      %s1052 = sadd.s32 %s1050, %s1051
      %s1053 = smul.addr %s1052, 8
      %s1054 = scalar_lea.vmem %s4, %s1053
      // Predicated region
      $region37: #{mfcc_layer_forward.2} parent=35 // pred_check
        %p1055 = pneg %p138
      $region38: #{mfcc_layer_forward.2} parent=35 // pred_check_branch
        %1057 = sbr.rel (%p1055) target = $region40
      $region39: #{mfcc_layer_forward.2} parent=35 // pred_region
        _
      $region40: #{mfcc_layer_forward.2} parent=35 // pred_fallthru
        _
    $region36: #{mfcc_layer_forward.2} parent=5 // pred_fallthru
      _
    %p1058 = scmp.le.s32.totalorder 2, %s10
    // Predicated region
    $region41: #{mfcc_layer_forward.2} parent=5 // pred_check
      %p1059 = pneg %p1058
    $region42: #{mfcc_layer_forward.2} parent=5 // pred_check_branch
      %1061 = sbr.rel (%p1059) target = $region44
    $region43: #{mfcc_layer_forward.2} parent=5 // pred_region
      %s1062 = ssub.s32 %s10, 2
      // Predicated region
      $region45: #{mfcc_layer_forward.2} parent=43 // pred_check
        %p1063 = pneg %p144
      $region46: #{mfcc_layer_forward.2} parent=43 // pred_check_branch
        %1065 = sbr.rel (%p1063) target = $region48
      $region47: #{mfcc_layer_forward.2} parent=43 // pred_region
        %p1066 = scmp.lt.s32.totalorder %s21, 1
        %s1067 = scalar_select %p1066, %s21, 1
        %p1068 = scmp.lt.s32.totalorder %s22, 0
        %s1069 = scalar_select %p1068, %s22, 0
        %s1070 = smul.addr %s1067, 2
        %s1071 = sadd.s32 %s1069, %s1070
        %s1072 = smul.addr %s1071, 8
        %s1073 = scalar_lea.vmem %s4, %s1072
      $region48: #{mfcc_layer_forward.2} parent=43 // pred_fallthru
        _
    $region44: #{mfcc_layer_forward.2} parent=5 // pred_fallthru
      _
  $region6: #{mfcc_layer_forward.2} parent=0 // loop_footer
    %s14 = sadd.s32 1, %s10
  $region7: #{mfcc_layer_forward.2} parent=0 // loop_footer_branch
    %9 = sbr.rel target = $region3
  $region8: #{mfcc_layer_forward.2} parent=0 // loop_exit
    _

// kernel: mfcc_layer_forward.3
$region0: #{mfcc_layer_forward.3}
  #allocation0 [shape = 'u32[]', space=smem, size = 0x4, offset = 0x4, fixed_abs, tag = 'smem constant byte address 0x4 - core index']
  #allocation1 [shape = 'u32[144,128]{1,0:T(1,128)}', space=vmem, size = 0x12000, scoped, tag = 'internal scratch']
  %s0 = inlined_call_operand.vmem [shape: f32[2,13,25], index: 0, kind: input, shape index: {}]
  %s1 = inlined_call_operand.vmem [shape: f32[3,13,1], index: 1, kind: input, shape index: {}]
  %s2 = inlined_call_operand.vmem [shape: f32[3,13,1], index: 2, kind: input, shape index: {}]
  %s3 = inlined_call_operand.vmem [shape: f32[2,3,13,17], index: 3, kind: output, shape index: {}]
  %s4 = sld [smem:[#allocation0]]
  $region45: #{mfcc_layer_forward.3} parent=0
    _
  %s6 = ssub.s32 1, %s4
  %s7 = scalar_select 0, %s6, %s4
  loop: start=0, step=1, limit=4
  $region2: #{mfcc_layer_forward.3} parent=0 // loop_pre_header
    _
  $region3: #{mfcc_layer_forward.3} parent=0 // loop_header
    %s9 = sphi 0, %s13
    %p10 = scmp.ge.s32.totalorder %s9, 4
    %s19 = sphi 0, %s21
    %s22 = sphi 0, %s19
    %s23 = sphi 0, %s22
    %s39 = sphi 0, %s23
    %s43 = sphi 0, %s43
    %s45 = sphi 0, %s43
    %s46 = sphi 0, %s45
    %s60 = sphi 0, %s46
    %s64 = sphi 0, %s64
    %s66 = sphi 0, %s64
    %s67 = sphi 0, %s66
    %s81 = sphi 0, %s67
    %s87 = sphi 0, %s89
    %s90 = sphi 0, %s87
    %s91 = sphi 0, %s90
    %s107 = sphi 0, %s91
  $region4: #{mfcc_layer_forward.3} parent=0 // loop_header_branch
    %12 = sbr.rel (%p10) target = $region8
  $region5: #{mfcc_layer_forward.3} parent=0 // loop_body
    %s14 = ssub.s32 %s9, 1
    %s15 = ssub.s32 %s9, 2
    %s16 = sadd.s32 %s9, 1
    %s17 = ssub.s32 %s9, %s16
    %p18 = scmp.eq.s32.totalorder %s17, 0
    %s20 = sadd.s32 %s19, 1
    %s21 = scalar_select %p18, %s19, %s20
    %p24 = pneg %p18
    %p25 = scmp.eq.s32.totalorder %s9, 1
    %p26 = por %p24, %p25
    %p27 = scmp.ne.s32.totalorder %s19, %s22
    %p28 = scmp.eq.s32.totalorder %s9, 0
    %p29 = por %p27, %p28
    %p30 = scmp.ne.s32.totalorder %s19, %s22
    %p31 = scmp.eq.s32.totalorder %s14, 1
    %p32 = por %p30, %p31
    %p33 = scmp.ne.s32.totalorder %s22, %s23
    %p34 = scmp.eq.s32.totalorder %s14, 0
    %p35 = por %p33, %p34
    %p36 = scmp.ne.s32.totalorder %s22, %s23
    %p37 = scmp.eq.s32.totalorder %s15, 1
    %p38 = por %p36, %p37
    %p40 = scmp.ne.s32.totalorder %s23, %s39
    %p41 = scmp.eq.s32.totalorder %s15, 0
    %p42 = por %p40, %p41
    %s44 = sadd.s32 %s43, 1
    %p47 = scmp.eq.s32.totalorder %s9, 1
    %p48 = scmp.ne.s32.totalorder %s43, %s45
    %p49 = scmp.eq.s32.totalorder %s9, 0
    %p50 = por %p48, %p49
    %p51 = scmp.ne.s32.totalorder %s43, %s45
    %p52 = scmp.eq.s32.totalorder %s14, 1
    %p53 = por %p51, %p52
    %p54 = scmp.ne.s32.totalorder %s45, %s46
    %p55 = scmp.eq.s32.totalorder %s14, 0
    %p56 = por %p54, %p55
    %p57 = scmp.ne.s32.totalorder %s45, %s46
    %p58 = scmp.eq.s32.totalorder %s15, 1
    %p59 = por %p57, %p58
    %p61 = scmp.ne.s32.totalorder %s46, %s60
    %p62 = scmp.eq.s32.totalorder %s15, 0
    %p63 = por %p61, %p62
    %s65 = sadd.s32 %s64, 1
    %p68 = scmp.eq.s32.totalorder %s9, 1
    %p69 = scmp.ne.s32.totalorder %s64, %s66
    %p70 = scmp.eq.s32.totalorder %s9, 0
    %p71 = por %p69, %p70
    %p72 = scmp.ne.s32.totalorder %s64, %s66
    %p73 = scmp.eq.s32.totalorder %s14, 1
    %p74 = por %p72, %p73
    %p75 = scmp.ne.s32.totalorder %s66, %s67
    %p76 = scmp.eq.s32.totalorder %s14, 0
    %p77 = por %p75, %p76
    %p78 = scmp.ne.s32.totalorder %s66, %s67
    %p79 = scmp.eq.s32.totalorder %s15, 1
    %p80 = por %p78, %p79
    %p82 = scmp.ne.s32.totalorder %s67, %s81
    %p83 = scmp.eq.s32.totalorder %s15, 0
    %p84 = por %p82, %p83
    %s85 = ssub.s32 %s9, %s16
    %p86 = scmp.eq.s32.totalorder %s85, 0
    %s88 = sadd.s32 %s87, 1
    %s89 = scalar_select %p86, %s87, %s88
    %p92 = pneg %p86
    %p93 = scmp.eq.s32.totalorder %s9, 1
    %p94 = por %p92, %p93
    %p95 = scmp.ne.s32.totalorder %s87, %s90
    %p96 = scmp.eq.s32.totalorder %s9, 0
    %p97 = por %p95, %p96
    %p98 = scmp.ne.s32.totalorder %s87, %s90
    %p99 = scmp.eq.s32.totalorder %s14, 1
    %p100 = por %p98, %p99
    %p101 = scmp.ne.s32.totalorder %s90, %s91
    %p102 = scmp.eq.s32.totalorder %s14, 0
    %p103 = por %p101, %p102
    %p104 = scmp.ne.s32.totalorder %s90, %s91
    %p105 = scmp.eq.s32.totalorder %s15, 1
    %p106 = por %p104, %p105
    %p108 = scmp.ne.s32.totalorder %s91, %s107
    %p109 = scmp.eq.s32.totalorder %s15, 0
    %p110 = por %p108, %p109
    %p111 = scmp.le.s32.totalorder 1, %s9
    %p112 = scmp.lt.s32.totalorder %s9, 3
    %p113 = pnand %p111, %p112
    %p114 = pneg %p113
    // Predicated region
    $region9: #{mfcc_layer_forward.3} parent=5 // pred_check
      _
    $region10: #{mfcc_layer_forward.3} parent=5 // pred_check_branch
      %116 = sbr.rel (%p113) target = $region12
    $region11: #{mfcc_layer_forward.3} parent=5 // pred_region
      %s117 = ssub.s32 %s9, 1
      // Predicated region
      $region13: #{mfcc_layer_forward.3} parent=11 // pred_check
        %p118 = pneg %p56
      $region14: #{mfcc_layer_forward.3} parent=11 // pred_check_branch
        %120 = sbr.rel (%p118) target = $region16
      $region15: #{mfcc_layer_forward.3} parent=11 // pred_region
        _
      $region16: #{mfcc_layer_forward.3} parent=11 // pred_fallthru
        _
      // Predicated region
      $region17: #{mfcc_layer_forward.3} parent=11 // pred_check
        %p121 = pneg %p77
      $region18: #{mfcc_layer_forward.3} parent=11 // pred_check_branch
        %123 = sbr.rel (%p121) target = $region20
      $region19: #{mfcc_layer_forward.3} parent=11 // pred_region
        _
      $region20: #{mfcc_layer_forward.3} parent=11 // pred_fallthru
        _
    $region12: #{mfcc_layer_forward.3} parent=5 // pred_fallthru
      _
    %p124 = scmp.lt.s32.totalorder %s9, 2
    // Predicated region
    $region21: #{mfcc_layer_forward.3} parent=5 // pred_check
      %p125 = pneg %p124
    $region22: #{mfcc_layer_forward.3} parent=5 // pred_check_branch
      %127 = sbr.rel (%p125) target = $region24
    $region23: #{mfcc_layer_forward.3} parent=5 // pred_region
      // Predicated region
      $region25: #{mfcc_layer_forward.3} parent=23 // pred_check
        %p128 = pneg %p29
      $region26: #{mfcc_layer_forward.3} parent=23 // pred_check_branch
        %130 = sbr.rel (%p128) target = $region28
      $region27: #{mfcc_layer_forward.3} parent=23 // pred_region
        %p131 = scmp.lt.s32.totalorder %s9, 1
        %s132 = scalar_select %p131, %s9, 1
        %s133 = smul.addr %s132, 2
        %s134 = smul.addr %s133, 8
        %s135 = scalar_lea.vmem %s0, %s134
      $region28: #{mfcc_layer_forward.3} parent=23 // pred_fallthru
        _
    $region24: #{mfcc_layer_forward.3} parent=5 // pred_fallthru
      _
    %p136 = scmp.le.s32.totalorder 1, %s9
    %p137 = scmp.lt.s32.totalorder %s9, 3
    %p138 = pnand %p136, %p137
    %p139 = pneg %p138
    // Predicated region
    $region29: #{mfcc_layer_forward.3} parent=5 // pred_check
      _
    $region30: #{mfcc_layer_forward.3} parent=5 // pred_check_branch
      %141 = sbr.rel (%p138) target = $region32
    $region31: #{mfcc_layer_forward.3} parent=5 // pred_region
      %s142 = ssub.s32 %s9, 1
      %p143 = scmp.lt.s32.totalorder %s14, 1
      %s144 = scalar_select %p143, %s14, 1
      %s145 = smul.addr %s144, 2
      %s146 = smul.addr %s145, 8
      %s147 = scalar_lea.vmem %s0, %s146
      %p148 = pneg %p35
      %p149 = pneg %p32
      %p150 = pneg %p56
      %p151 = pneg %p53
      %p152 = pneg %p77
      %p153 = pneg %p74
      %p154 = pneg %p103
      %p155 = pneg %p100
      %p156 = scmp.lt.s32.totalorder %s14, 1
      %s157 = scalar_select %p156, %s14, 1
      %s158 = smul.addr %s157, 6
      %s159 = smul.addr %s158, 8
      %s160 = scalar_lea.vmem %s3, %s159
      %p161 = scmp.lt.s32.totalorder %s14, 1
      %s162 = scalar_select %p161, %s14, 1
      %s163 = smul.addr %s162, 2
      %s164 = smul.addr %s163, 8
      %s165 = scalar_lea.vmem %s0, %s164
      %p166 = scmp.lt.s32.totalorder %s14, 1
      %s167 = scalar_select %p166, %s14, 1
      %s168 = smul.addr %s167, 6
      %s169 = smul.addr %s168, 8
      %s170 = scalar_lea.vmem %s3, %s169
      %v171 = vld [vmem:[%s165] sm:$0xff]
      %v172 = vld [vmem:[%s165 + $0x8] sm:$0x1f]
      %175 = vrot.lane.b32.xlu0 %v171, 4
      %v176 = vpop.permute.xlu0 %175
      %177 = vrot.lane.b32.xlu0 %v172, 4
      %v178 = vpop.permute.xlu0 %177
      %v181 = vsub.f32 %v171, %v176
      %v182 = vsub.f32 %v172, %v178
      %v183 = vmul.f32 %v181, 2.0
      %v184 = vmul.f32 %v182, 2.0
      %185 = vrot.lane.b32.xlu0 %v171, 2
      %v186 = vpop.permute.xlu0 %185
      %187 = vrot.lane.b32.xlu0 %v172, 2
      %v188 = vpop.permute.xlu0 %187
      %v191 = vsub.f32 %v171, %v186
      %v192 = vsub.f32 %v172, %v188
      %195 = vrot.lane.b32.xlu0 %v191, 1
      %v196 = vpop.permute.xlu0 %195
      %197 = vrot.lane.b32.xlu0 %v192, 1
      %v198 = vpop.permute.xlu0 %197
      %v201 = vadd.f32 %v183, %v196
      %v202 = vadd.f32 %v184, %v198
      %v203 = vmul.f32 %v201, 0.1
      %v204 = vmul.f32 %v202, 0.1
      %v205 = vlaneseq
      %v206 = vand.u32 %v205, 127
      %vm207 = vcmp.lt.s32.totalorder %v206, 2
      %209 = vset.pattern.permute.xlu0 6
      %210 = vperm.xlu0 %209, %v203
      %v211 = vpop.permute.xlu0 %210
      %214 = vset.pattern.permute.xlu0 6
      %215 = vperm.xlu0 %214, %v204
      %v216 = vpop.permute.xlu0 %215
      %218 = vrot.lane.b32.xlu0 %v203, 124
      %v219 = vpop.permute.xlu0 %218
      %220 = vrot.lane.b32.xlu0 %v204, 124
      %v221 = vpop.permute.xlu0 %220
      %v224 = vsel %vm207, %v211, %v219
      %v225 = vsel %vm207, %v216, %v221
      %vm226 = vcmp.ge.s32.totalorder %v206, 19
      %228 = vset.pattern.permute.xlu0 18
      %229 = vperm.xlu0 %228, %v224
      %v230 = vpop.permute.xlu0 %229
      %233 = vset.pattern.permute.xlu0 18
      %234 = vperm.xlu0 %233, %v225
      %v235 = vpop.permute.xlu0 %234
      %v237 = vsel %vm226, %v230, %v224
      %v238 = vsel %vm226, %v235, %v225
      %241 = vrot.lane.b32.xlu0 %v237, 4
      %v242 = vpop.permute.xlu0 %241
      %243 = vrot.lane.b32.xlu0 %v238, 4
      %v244 = vpop.permute.xlu0 %243
      %v247 = vsub.f32 %v237, %v242
      %v248 = vsub.f32 %v238, %v244
      %v249 = vmul.f32 %v247, 2.0
      %v250 = vmul.f32 %v248, 2.0
      %251 = vrot.lane.b32.xlu0 %v237, 2
      %v252 = vpop.permute.xlu0 %251
      %253 = vrot.lane.b32.xlu0 %v238, 2
      %v254 = vpop.permute.xlu0 %253
      %v257 = vsub.f32 %v237, %v252
      %v258 = vsub.f32 %v238, %v254
      %261 = vrot.lane.b32.xlu0 %v257, 1
      %v262 = vpop.permute.xlu0 %261
      %263 = vrot.lane.b32.xlu0 %v258, 1
      %v264 = vpop.permute.xlu0 %263
      %v267 = vadd.f32 %v249, %v262
      %v268 = vadd.f32 %v250, %v264
      %v269 = vmul.f32 %v267, 0.1
      %v270 = vmul.f32 %v268, 0.1
      %v271 = vld [vmem:[%s1] sm:$0xff]
      %v272 = vld [vmem:[%s1 + $0x8] sm:$0x1f]
      %274 = vset.pattern.permute.xlu0 0
      %275 = vperm.xlu0 %274, %v271
      %v276 = vpop.permute.xlu0 %275
      %279 = vset.pattern.permute.xlu0 0
      %280 = vperm.xlu0 %279, %v272
      %v281 = vpop.permute.xlu0 %280
      %v283 = vmul.f32 %v171, %v276
      %v284 = vmul.f32 %v172, %v281
      %v285 = vld [vmem:[%s2] sm:$0xff]
      %v286 = vld [vmem:[%s2 + $0x8] sm:$0x1f]
      %288 = vset.pattern.permute.xlu0 0
      %289 = vperm.xlu0 %288, %v285
      %v290 = vpop.permute.xlu0 %289
      %293 = vset.pattern.permute.xlu0 0
      %294 = vperm.xlu0 %293, %v286
      %v295 = vpop.permute.xlu0 %294
      %v297 = vadd.f32 %v283, %v290
      %v298 = vadd.f32 %v284, %v295
      %301 = vrot.lane.b32.xlu0 %v297, 124
      %v302 = vpop.permute.xlu0 %301
      %303 = vrot.lane.b32.xlu0 %v298, 124
      %v304 = vpop.permute.xlu0 %303
      %vm307 = vcmask 138240
      %308 = vst.msk [vmem:[%s170] sm:$0xff] %vm307, %v302
      %vm309 = vcmask 135168
      %310 = vst.msk [vmem:[%s170 + $0x8] sm:$0x1f] %vm309, %v304
      %s311 = scalar_lea.vmem %s1, 16
      %v312 = vld [vmem:[%s311] sm:$0xff]
      %v313 = vld [vmem:[%s311 + $0x8] sm:$0x1f]
      %315 = vset.pattern.permute.xlu0 0
      %316 = vperm.xlu0 %315, %v312
      %v317 = vpop.permute.xlu0 %316
      %320 = vset.pattern.permute.xlu0 0
      %321 = vperm.xlu0 %320, %v313
      %v322 = vpop.permute.xlu0 %321
      %v324 = vmul.f32 %v237, %v317
      %v325 = vmul.f32 %v238, %v322
      %s326 = scalar_lea.vmem %s2, 16
      %v327 = vld [vmem:[%s326] sm:$0xff]
      %v328 = vld [vmem:[%s326 + $0x8] sm:$0x1f]
      %330 = vset.pattern.permute.xlu0 0
      %331 = vperm.xlu0 %330, %v327
      %v332 = vpop.permute.xlu0 %331
      %335 = vset.pattern.permute.xlu0 0
      %336 = vperm.xlu0 %335, %v328
      %v337 = vpop.permute.xlu0 %336
      %v339 = vadd.f32 %v324, %v332
      %v340 = vadd.f32 %v325, %v337
      %343 = vrot.lane.b32.xlu0 %v339, 126
      %v344 = vpop.permute.xlu0 %343
      %345 = vrot.lane.b32.xlu0 %v340, 126
      %v346 = vpop.permute.xlu0 %345
      %s349 = scalar_lea.vmem %s170, 16
      %350 = vst.msk [vmem:[%s349] sm:$0xff] %vm307, %v344
      %351 = vst.msk [vmem:[%s349 + $0x8] sm:$0x1f] %vm309, %v346
      %s352 = scalar_lea.vmem %s1, 32
      %v353 = vld [vmem:[%s352] sm:$0xff]
      %v354 = vld [vmem:[%s352 + $0x8] sm:$0x1f]
      %356 = vset.pattern.permute.xlu0 0
      %357 = vperm.xlu0 %356, %v353
      %v358 = vpop.permute.xlu0 %357
      %361 = vset.pattern.permute.xlu0 0
      %362 = vperm.xlu0 %361, %v354
      %v363 = vpop.permute.xlu0 %362
      %v365 = vmul.f32 %v269, %v358
      %v366 = vmul.f32 %v270, %v363
      %s367 = scalar_lea.vmem %s2, 32
      %v368 = vld [vmem:[%s367] sm:$0xff]
      %v369 = vld [vmem:[%s367 + $0x8] sm:$0x1f]
      %371 = vset.pattern.permute.xlu0 0
      %372 = vperm.xlu0 %371, %v368
      %v373 = vpop.permute.xlu0 %372
      %376 = vset.pattern.permute.xlu0 0
      %377 = vperm.xlu0 %376, %v369
      %v378 = vpop.permute.xlu0 %377
      %v380 = vadd.f32 %v365, %v373
      %v381 = vadd.f32 %v366, %v378
      %384 = vrot.lane.b32.xlu0 %v380, 124
      %v385 = vpop.permute.xlu0 %384
      %386 = vrot.lane.b32.xlu0 %v381, 124
      %v387 = vpop.permute.xlu0 %386
      %s390 = scalar_lea.vmem %s170, 32
      %391 = vst.msk [vmem:[%s390] sm:$0xff] %vm307, %v385
      %392 = vst.msk [vmem:[%s390 + $0x8] sm:$0x1f] %vm309, %v387
      %p393 = scmp.lt.s32.totalorder %s14, 1
      %s394 = scalar_select %p393, %s14, 1
      %s395 = smul.addr %s394, 6
      %s396 = smul.addr %s395, 8
      %s397 = scalar_lea.vmem %s3, %s396
      // Predicated region
      $region33: #{mfcc_layer_forward.3} parent=31 // pred_check
        %p398 = pneg %p100
      $region34: #{mfcc_layer_forward.3} parent=31 // pred_check_branch
        %400 = sbr.rel (%p398) target = $region36
      $region35: #{mfcc_layer_forward.3} parent=31 // pred_region
        _
      $region36: #{mfcc_layer_forward.3} parent=31 // pred_fallthru
        _
    $region32: #{mfcc_layer_forward.3} parent=5 // pred_fallthru
      _
    %p401 = scmp.le.s32.totalorder 2, %s9
    // Predicated region
    $region37: #{mfcc_layer_forward.3} parent=5 // pred_check
      %p402 = pneg %p401
    $region38: #{mfcc_layer_forward.3} parent=5 // pred_check_branch
      %404 = sbr.rel (%p402) target = $region40
    $region39: #{mfcc_layer_forward.3} parent=5 // pred_region
      %s405 = ssub.s32 %s9, 2
      // Predicated region
      $region41: #{mfcc_layer_forward.3} parent=39 // pred_check
        %p406 = pneg %p106
      $region42: #{mfcc_layer_forward.3} parent=39 // pred_check_branch
        %408 = sbr.rel (%p406) target = $region44
      $region43: #{mfcc_layer_forward.3} parent=39 // pred_region
        %p409 = scmp.lt.s32.totalorder %s15, 1
        %s410 = scalar_select %p409, %s15, 1
        %s411 = smul.addr %s410, 6
        %s412 = smul.addr %s411, 8
        %s413 = scalar_lea.vmem %s3, %s412
      $region44: #{mfcc_layer_forward.3} parent=39 // pred_fallthru
        _
    $region40: #{mfcc_layer_forward.3} parent=5 // pred_fallthru
      _
  $region6: #{mfcc_layer_forward.3} parent=0 // loop_footer
    %s13 = sadd.s32 1, %s9
  $region7: #{mfcc_layer_forward.3} parent=0 // loop_footer_branch
    %8 = sbr.rel target = $region3
  $region8: #{mfcc_layer_forward.3} parent=0 // loop_exit
    _

</llo_original>
